<compile_context>
chip_gen: v7x
topology: tpu7x:2x2x1
jax: 0.10.0
libtpu: 0.0.40
codegen_flags: <defaults>
</compile_context>

<pallas_src>
import functools
import math

import jax
import jax.numpy as jnp
import numpy as np
from jax.experimental import pallas as pl
from jax.experimental.pallas import tpu as pltpu


def mha_kernel(*refs, n_heads, head_dim, cache_kv, return_attention):
    (q_ref, k_ref, v_ref, m_ref,
     wq_ref, wk_ref, wv_ref, wo_ref, b_ref) = refs[:9]
    if return_attention:
        o_ref, attn_ref = refs[9], refs[10]
        kT_s, v_s, neg_s = refs[11:]
    else:
        o_ref, attn_ref = refs[9], None
        kT_s, v_s, neg_s = refs[10:]

    qt = pl.program_id(1)
    mm = wq_ref.dtype                                  # matmul input dtype (bf16)
    inv_scale = jnp.float32(1.0 / math.sqrt(head_dim))

    # ---- K / V projections + additive mask: once per batch (cached in VMEM) -----
    def project_kv():
        # Additive mask in f32 (note: a fully-masked row degenerates to a uniform
        # softmax row, matching the PyTorch masked_fill(-1e10) behaviour).
        neg_s[...] = jnp.where(m_ref[0] == 0.0,
                               jnp.float32(-1e10), jnp.float32(0.0))      # [1, Sk]
        k_full = jnp.dot(k_ref[0], wk_ref[...],
                         preferred_element_type=jnp.float32) + b_ref[1:2, :]
        v_full = jnp.dot(v_ref[0], wv_ref[...],
                         preferred_element_type=jnp.float32) + b_ref[2:3, :]
        # Per-head copies happen only here (once per batch, off the steady-state
        # query-tile path).  K is stored pre-transposed so each head tile is
        # lane-dense in Sk and QK^T needs no per-tile relayout.
        # TODO(synk): with head_dim padded to 128 this becomes one aligned store.
        for h in range(n_heads):
            lo = h * head_dim
            kT_s[h] = k_full[:, lo:lo + head_dim].T.astype(mm)            # [hd, Sk]
            v_s[h] = v_full[:, lo:lo + head_dim].astype(mm)               # [Sk, hd]

    if cache_kv:
        pl.when(qt == 0)(project_kv)   # requires the qt grid axis to be "arbitrary"
    else:
        project_kv()                   # recompute per tile -> qt axis can be parallel

    # ---- Q projection for this query tile (1/sqrt(hd) folded into Q) ------------
    q_full = (jnp.dot(q_ref[0], wq_ref[...],
                      preferred_element_type=jnp.float32) + b_ref[0:1, :]) * inv_scale
    neg = neg_s[...]                                                       # [1, Sk]

    # ---- per-head attention: only lane-window reads, lane-dense writes ----------
    out_acc = None
    for h in range(n_heads):
        lo = h * head_dim
        qh = q_full[:, lo:lo + head_dim].astype(mm)                        # [tq, hd]
        e = jnp.dot(qh, kT_s[h], preferred_element_type=jnp.float32)       # [tq, Sk]
        e = e + neg                                                        # mask (f32)
        e = e - jnp.max(e, axis=-1, keepdims=True)                         # stable
        p = jnp.exp(e)
        # approx reciprocal: attention rows sum to 1 only up to EUP approx error.
        attn = p * pl.reciprocal(jnp.sum(p, axis=-1, keepdims=True), approx=True)
        if return_attention:
            attn_ref[0, h] = attn.astype(attn_ref.dtype)
        # TODO(synk): nn.Dropout(attention) is identity here (inference / eval mode).
        oh = jnp.dot(attn.astype(mm), v_s[h],
                     preferred_element_type=jnp.float32)                   # [tq, hd]
        # fc_o as per-head partial folds: full-lane [tq, H] outputs, f32 vreg
        # accumulation, zero masked stores.  (With head_dim padded to 128 a single
        # full-K matmul over concatenated heads is preferable — see TODO above.)
        part = jnp.dot(oh.astype(mm), wo_ref[lo:lo + head_dim, :],
                       preferred_element_type=jnp.float32)                 # [tq, H]
        out_acc = part if out_acc is None else out_acc + part

    o_ref[0] = (out_acc + b_ref[3:4, :]).astype(o_ref.dtype)


def _tpu_defaults():
    """Per-generation (q_tile, vmem_limit_bytes)."""
    try:
        kind = jax.devices()[0].device_kind.lower()
    except Exception:
        kind = ""
    if "v6" in kind:                       # 128 MiB VMEM, 2x256^2 MXU -> big tiles
        return 256, 100 * 1024 * 1024
    if "v5e" in kind or "v5 lite" in kind or "v5lite" in kind:
        return 128, 96 * 1024 * 1024
    # v7x (64 MiB physical VMEM per TensorCore) and unknown chips: conservative.
    return 64, 48 * 1024 * 1024


def multi_head_attention(query, key, value, mask, params, n_heads, *,
                         q_tile=None, matmul_dtype=jnp.bfloat16,
                         out_dtype=jnp.float32, attn_dtype=jnp.float32,
                         return_attention=True, vmem_limit_bytes=None):
    B, Sq, H = query.shape
    Sk = key.shape[1]
    assert H % n_heads == 0
    head_dim = H // n_heads

    default_tq, default_vmem = _tpu_defaults()
    if q_tile is None:
        q_tile = default_tq
    if vmem_limit_bytes is None:
        vmem_limit_bytes = default_vmem

    if mask is None:
        mask = jnp.ones((B, Sk), jnp.float32)
    mask3 = mask.astype(jnp.float32).reshape(B, 1, Sk)

    # Query-tile axis bounds VMEM at large Sq and gives the pipeline >= B iterations.
    tq = min(q_tile, Sq)
    if Sq % tq != 0:
        tq = Sq   # TODO(synk): ragged-tile masking path instead of one full-Sq tile.
    n_qt = Sq // tq

    # Cache K/V per batch only when it pays off AND batch parallelism already feeds
    # both TensorCores; otherwise recompute per tile so qt can be "parallel" (v7x).
    cache_kv = (B >= 2) and (n_qt > 1)
    qt_semantics = "arbitrary" if cache_kv else "parallel"

    # bf16 activations + weights: halves DMA bytes / input VMEM blocks.
    q_in = query.astype(matmul_dtype)
    k_in = key.astype(matmul_dtype)
    v_in = value.astype(matmul_dtype)
    wq = params["wq"].astype(matmul_dtype)
    wk = params["wk"].astype(matmul_dtype)
    wv = params["wv"].astype(matmul_dtype)
    wo = params["wo"].astype(matmul_dtype)
    biases = jnp.concatenate(
        [params["bq"], params["bk"], params["bv"], params["bo"]], axis=0)  # [4, H] f32

    def full(shape):
        return pl.BlockSpec(shape, lambda b, t: (0,) * len(shape))

    in_specs = [
        pl.BlockSpec((1, tq, H), lambda b, t: (b, t, 0)),    # query tile  (bf16)
        pl.BlockSpec((1, Sk, H), lambda b, t: (b, 0, 0)),    # key   full  (bf16)
        pl.BlockSpec((1, Sk, H), lambda b, t: (b, 0, 0)),    # value full  (bf16)
        pl.BlockSpec((1, 1, Sk), lambda b, t: (b, 0, 0)),    # mask        (f32)
        full((H, H)), full((H, H)), full((H, H)), full((H, H)),  # wq wk wv wo
        full((4, H)),                                         # packed biases (f32)
    ]

    x_spec = pl.BlockSpec((1, tq, H), lambda b, t: (b, t, 0))
    x_shape = jax.ShapeDtypeStruct((B, Sq, H), out_dtype)
    if return_attention:
        out_specs = (x_spec,
                     pl.BlockSpec((1, n_heads, tq, Sk), lambda b, t: (b, 0, t, 0)))
        out_shape = (x_shape,
                     jax.ShapeDtypeStruct((B, n_heads, Sq, Sk), attn_dtype))
    else:
        out_specs = x_spec
        out_shape = x_shape

    scratch_shapes = [
        pltpu.VMEM((n_heads, head_dim, Sk), matmul_dtype),   # K^T heads (per-batch)
        pltpu.VMEM((n_heads, Sk, head_dim), matmul_dtype),   # V heads   (per-batch)
        pltpu.VMEM((1, Sk), jnp.float32),                    # additive mask cache
    ]

    act_bytes = jnp.dtype(matmul_dtype).itemsize
    flops = int(B * (4 * Sq * H * H + 4 * Sk * H * H + 4 * Sq * Sk * H))
    transcendentals = int(B * n_heads * Sq * Sk)
    bytes_accessed = int(
        (query.size + key.size + value.size) * act_bytes
        + mask3.size * 4
        + (wq.size + wk.size + wv.size + wo.size) * act_bytes + biases.size * 4
        + B * Sq * H * jnp.dtype(out_dtype).itemsize
        + (B * n_heads * Sq * Sk * jnp.dtype(attn_dtype).itemsize
           if return_attention else 0))

    kernel = functools.partial(mha_kernel, n_heads=n_heads, head_dim=head_dim,
                               cache_kv=cache_kv, return_attention=return_attention)
    return pl.pallas_call(
        kernel,
        out_shape=out_shape,
        grid_spec=pltpu.PrefetchScalarGridSpec(
            num_scalar_prefetch=0,
            grid=(B, n_qt),
            in_specs=in_specs,
            out_specs=out_specs,
            scratch_shapes=scratch_shapes,
        ),
        compiler_params=pltpu.CompilerParams(
            dimension_semantics=("parallel", qt_semantics),
            vmem_limit_bytes=vmem_limit_bytes,
        ),
        cost_estimate=pl.CostEstimate(
            flops=flops, transcendentals=transcendentals,
            bytes_accessed=bytes_accessed),
    )(q_in, k_in, v_in, mask3, wq, wk, wv, wo, biases)


# ----------------------------- pure-JAX reference -----------------------------
def mha_ref(query, key, value, mask, params, n_heads):
    B, Sq, H = query.shape
    Sk = key.shape[1]
    hd = H // n_heads
    lin = lambda x, w, b: x @ w + b[0]
    Q = lin(query, params["wq"], params["bq"]).reshape(B, Sq, n_heads, hd).transpose(0, 2, 1, 3)
    K = lin(key, params["wk"], params["bk"]).reshape(B, Sk, n_heads, hd).transpose(0, 2, 1, 3)
    V = lin(value, params["wv"], params["bv"]).reshape(B, Sk, n_heads, hd).transpose(0, 2, 1, 3)
    e = jnp.einsum("bhqd,bhkd->bhqk", Q, K) / jnp.sqrt(jnp.float32(hd))
    e = jnp.where(mask[:, None, None, :] == 0, -1e10, e)
    a = jax.nn.softmax(e, axis=-1)
    x = jnp.einsum("bhqk,bhkd->bhqd", a, V).transpose(0, 2, 1, 3).reshape(B, Sq, H)
    x = lin(x, params["wo"], params["bo"])
    return x, a


def init_params(key, hid_dim):
    ks = jax.random.split(key, 8)

    def lin_init(kw, kb, fan_in, fan_out):
        bound = 1.0 / math.sqrt(fan_in)
        w = jax.random.uniform(kw, (fan_in, fan_out), jnp.float32, -bound, bound)
        b = jax.random.uniform(kb, (1, fan_out), jnp.float32, -bound, bound)
        return w, b

    wq, bq = lin_init(ks[0], ks[1], hid_dim, hid_dim)
    wk, bk = lin_init(ks[2], ks[3], hid_dim, hid_dim)
    wv, bv = lin_init(ks[4], ks[5], hid_dim, hid_dim)
    wo, bo = lin_init(ks[6], ks[7], hid_dim, hid_dim)
    return dict(wq=wq, bq=bq, wk=wk, bk=bk, wv=wv, bv=bv, wo=wo, bo=bo)


if __name__ == "__main__":
    B, S, H, N_HEADS = 2, 16, 32, 4
    root = jax.random.PRNGKey(0)
    kq, kk, kv, kp = jax.random.split(root, 4)
    query = jax.random.normal(kq, (B, S, H), jnp.float32)
    key_t = jax.random.normal(kk, (B, S, H), jnp.float32)
    value = jax.random.normal(kv, (B, S, H), jnp.float32)
    # mask: keep everything in batch 0; mask the last three key positions of batch 1
    src_mask = jnp.ones((B, S), jnp.float32).at[1, S - 3:].set(0.0)
    params = init_params(kp, H)

    ref_out, ref_attn = mha_ref(query, key_t, value, src_mask, params, N_HEADS)

    # Path 1: full module semantics (x, attention); two query tiles per batch so the
    # per-batch K/V cache (pl.when(qt == 0), "arbitrary" qt axis) is exercised.
    out, attn = multi_head_attention(query, key_t, value, src_mask, params, N_HEADS,
                                     q_tile=8)
    out = jax.block_until_ready(out)
    attn = jax.block_until_ready(attn)
    # bf16 matmul inputs (f32 accumulation) -> loosened tolerance vs. f32 reference.
    np.testing.assert_allclose(np.asarray(out), np.asarray(ref_out), rtol=3e-2, atol=3e-2)
    np.testing.assert_allclose(np.asarray(attn), np.asarray(ref_attn), rtol=3e-2, atol=3e-2)

    # Path 2: drop the attention-weights output (the big HBM-writeback / VMEM lever).
    out2 = multi_head_attention(query, key_t, value, src_mask, params, N_HEADS,
                                return_attention=False)
    out2 = jax.block_until_ready(out2)
    np.testing.assert_allclose(np.asarray(out2), np.asarray(ref_out), rtol=3e-2, atol=3e-2)

    print("KERNEL_OK")
</pallas_src>

<mosaic_0001>
module attributes {stable_mosaic.version = 11 : i64} {
  func.func @mha_kernel(%arg0: i32, %arg1: i32, %arg2: memref<1x8x32xbf16, #tpu.memory_space<vmem>>, %arg3: memref<1x16x32xbf16, #tpu.memory_space<vmem>>, %arg4: memref<1x16x32xbf16, #tpu.memory_space<vmem>>, %arg5: memref<1x1x16xf32, #tpu.memory_space<vmem>>, %arg6: memref<32x32xbf16, #tpu.memory_space<vmem>>, %arg7: memref<32x32xbf16, #tpu.memory_space<vmem>>, %arg8: memref<32x32xbf16, #tpu.memory_space<vmem>>, %arg9: memref<32x32xbf16, #tpu.memory_space<vmem>>, %arg10: memref<4x32xf32, #tpu.memory_space<vmem>>, %arg11: memref<1x8x32xf32, #tpu.memory_space<vmem>>, %arg12: memref<1x4x8x16xf32, #tpu.memory_space<vmem>>, %arg13: memref<4x8x16xbf16, #tpu.memory_space<vmem>>, %arg14: memref<4x16x8xbf16, #tpu.memory_space<vmem>>, %arg15: memref<1x16xf32, #tpu.memory_space<vmem>>) attributes {dimension_semantics = [#tpu.dimension_semantics<parallel>, #tpu.dimension_semantics<arbitrary>], iteration_bounds = array<i64: 2, 2>, scalar_prefetch = 0 : i64, scratch_operands = 3 : i64, tpu.core_type = #tpu.core_type<tc>, window_params = [{transform_indices = @transform_0, window_bounds = array<i64: 1, 8, 32>}, {transform_indices = @transform_1, window_bounds = array<i64: 1, 16, 32>}, {transform_indices = @transform_2, window_bounds = array<i64: 1, 16, 32>}, {transform_indices = @transform_3, window_bounds = array<i64: 1, 1, 16>}, {pipeline_mode = #tpu.pipeline_mode<synchronous>, transform_indices = @transform_4, window_bounds = array<i64: 32, 32>}, {pipeline_mode = #tpu.pipeline_mode<synchronous>, transform_indices = @transform_5, window_bounds = array<i64: 32, 32>}, {pipeline_mode = #tpu.pipeline_mode<synchronous>, transform_indices = @transform_6, window_bounds = array<i64: 32, 32>}, {pipeline_mode = #tpu.pipeline_mode<synchronous>, transform_indices = @transform_7, window_bounds = array<i64: 32, 32>}, {pipeline_mode = #tpu.pipeline_mode<synchronous>, transform_indices = @transform_8, window_bounds = array<i64: 4, 32>}, {transform_indices = @transform_9, window_bounds = array<i64: 1, 8, 32>}, {transform_indices = @transform_10, window_bounds = array<i64: 1, 4, 8, 16>}]} {
    %c0_i32 = arith.constant 0 : i32
    %0 = arith.cmpi eq, %arg1, %c0_i32 : i32
    %1 = arith.extui %0 : i1 to i32
    %c0_i32_0 = arith.constant 0 : i32
    %2 = arith.cmpi ne, %1, %c0_i32_0 : i32
    scf.if %2 {
      %c0_77 = arith.constant 0 : index
      %c0_78 = arith.constant 0 : index
      %c0_79 = arith.constant 0 : index
      %130 = vector.load %arg5[%c0_77, %c0_78, %c0_79] : memref<1x1x16xf32, #tpu.memory_space<vmem>>, vector<1x1x16xf32>
      %131 = vector.shape_cast %130 : vector<1x1x16xf32> to vector<1x16xf32>
      %cst_80 = arith.constant 0.000000e+00 : f32
      %132 = vector.broadcast %cst_80 : f32 to vector<1x16xf32>
      %133 = arith.cmpf oeq, %131, %132 : vector<1x16xf32>
      %cst_81 = arith.constant -1.000000e+10 : f32
      %cst_82 = arith.constant 0.000000e+00 : f32
      %134 = vector.broadcast %cst_81 : f32 to vector<1x16xf32>
      %135 = vector.broadcast %cst_82 : f32 to vector<1x16xf32>
      %136 = arith.select %133, %134, %135 : vector<1x16xi1>, vector<1x16xf32>
      %c0_83 = arith.constant 0 : index
      %c0_84 = arith.constant 0 : index
      %137 = vector.load %arg15[%c0_83, %c0_84] : memref<1x16xf32, #tpu.memory_space<vmem>>, vector<1x16xf32>
      tpu.vector_store %arg15[%c0_83, %c0_84], %136 {strides = array<i32>} : memref<1x16xf32, #tpu.memory_space<vmem>>, vector<1x16xf32>,
      %c0_85 = arith.constant 0 : index
      %c0_86 = arith.constant 0 : index
      %c0_87 = arith.constant 0 : index
      %138 = vector.load %arg3[%c0_85, %c0_86, %c0_87] : memref<1x16x32xbf16, #tpu.memory_space<vmem>>, vector<1x16x32xbf16>
      %139 = vector.shape_cast %138 : vector<1x16x32xbf16> to vector<16x32xbf16>
      %c0_88 = arith.constant 0 : index
      %c0_89 = arith.constant 0 : index
      %140 = vector.load %arg7[%c0_88, %c0_89] : memref<32x32xbf16, #tpu.memory_space<vmem>>, vector<32x32xbf16>
      %cst_90 = arith.constant dense<0.000000e+00> : vector<16x32xf32>
      %141 = tpu.matmul %139, %140, %cst_90 {dimension_numbers = #tpu.dot_dimension_numbers<[1], [0], [0], [1], [0, 0, 1, 1], [], []>} : vector<16x32xbf16>, vector<32x32xbf16>, vector<16x32xf32> -> vector<16x32xf32>
      %c1_91 = arith.constant 1 : index
      %c0_92 = arith.constant 0 : index
      %142 = vector.load %arg10[%c1_91, %c0_92] : memref<4x32xf32, #tpu.memory_space<vmem>>, vector<1x32xf32>
      %143 = vector.broadcast %142 : vector<1x32xf32> to vector<16x32xf32>
      %144 = arith.addf %141, %143 : vector<16x32xf32>
      %c0_93 = arith.constant 0 : index
      %c0_94 = arith.constant 0 : index
      %c0_95 = arith.constant 0 : index
      %145 = vector.load %arg4[%c0_93, %c0_94, %c0_95] : memref<1x16x32xbf16, #tpu.memory_space<vmem>>, vector<1x16x32xbf16>
      %146 = vector.shape_cast %145 : vector<1x16x32xbf16> to vector<16x32xbf16>
      %c0_96 = arith.constant 0 : index
      %c0_97 = arith.constant 0 : index
      %147 = vector.load %arg8[%c0_96, %c0_97] : memref<32x32xbf16, #tpu.memory_space<vmem>>, vector<32x32xbf16>
      %cst_98 = arith.constant dense<0.000000e+00> : vector<16x32xf32>
      %148 = tpu.matmul %146, %147, %cst_98 {dimension_numbers = #tpu.dot_dimension_numbers<[1], [0], [0], [1], [0, 0, 1, 1], [], []>} : vector<16x32xbf16>, vector<32x32xbf16>, vector<16x32xf32> -> vector<16x32xf32>
      %c2_99 = arith.constant 2 : index
      %c0_100 = arith.constant 0 : index
      %149 = vector.load %arg10[%c2_99, %c0_100] : memref<4x32xf32, #tpu.memory_space<vmem>>, vector<1x32xf32>
      %150 = vector.broadcast %149 : vector<1x32xf32> to vector<16x32xf32>
      %151 = arith.addf %148, %150 : vector<16x32xf32>
      %152 = vector.extract_strided_slice %144 {offsets = [0, 0], sizes = [16, 8], strides = [1, 1]} : vector<16x32xf32> to vector<16x8xf32>
      %153 = tpu.transpose %152, [1, 0] : vector<16x8xf32> -> vector<8x16xf32>
      %154 = arith.truncf %153 : vector<8x16xf32> to vector<8x16xbf16>
      %c0_101 = arith.constant 0 : index
      %c0_102 = arith.constant 0 : index
      %c0_103 = arith.constant 0 : index
      %155 = vector.load %arg13[%c0_101, %c0_102, %c0_103] : memref<4x8x16xbf16, #tpu.memory_space<vmem>>, vector<1x8x16xbf16>
      %156 = vector.shape_cast %155 : vector<1x8x16xbf16> to vector<8x16xbf16>
      %157 = vector.shape_cast %154 : vector<8x16xbf16> to vector<1x8x16xbf16>
      tpu.vector_store %arg13[%c0_101, %c0_102, %c0_103], %157 {strides = array<i32>} : memref<4x8x16xbf16, #tpu.memory_space<vmem>>, vector<1x8x16xbf16>,
      %158 = vector.extract_strided_slice %151 {offsets = [0, 0], sizes = [16, 8], strides = [1, 1]} : vector<16x32xf32> to vector<16x8xf32>
      %159 = arith.truncf %158 : vector<16x8xf32> to vector<16x8xbf16>
      %c0_104 = arith.constant 0 : index
      %c0_105 = arith.constant 0 : index
      %c0_106 = arith.constant 0 : index
      %160 = vector.load %arg14[%c0_104, %c0_105, %c0_106] : memref<4x16x8xbf16, #tpu.memory_space<vmem>>, vector<1x16x8xbf16>
      %161 = vector.shape_cast %160 : vector<1x16x8xbf16> to vector<16x8xbf16>
      %162 = vector.shape_cast %159 : vector<16x8xbf16> to vector<1x16x8xbf16>
      tpu.vector_store %arg14[%c0_104, %c0_105, %c0_106], %162 {strides = array<i32>} : memref<4x16x8xbf16, #tpu.memory_space<vmem>>, vector<1x16x8xbf16>,
      %163 = vector.extract_strided_slice %144 {offsets = [0, 8], sizes = [16, 8], strides = [1, 1]} : vector<16x32xf32> to vector<16x8xf32>
      %164 = tpu.transpose %163, [1, 0] : vector<16x8xf32> -> vector<8x16xf32>
      %165 = arith.truncf %164 : vector<8x16xf32> to vector<8x16xbf16>
      %c1_107 = arith.constant 1 : index
      %c0_108 = arith.constant 0 : index
      %c0_109 = arith.constant 0 : index
      %166 = vector.load %arg13[%c1_107, %c0_108, %c0_109] : memref<4x8x16xbf16, #tpu.memory_space<vmem>>, vector<1x8x16xbf16>
      %167 = vector.shape_cast %166 : vector<1x8x16xbf16> to vector<8x16xbf16>
      %168 = vector.shape_cast %165 : vector<8x16xbf16> to vector<1x8x16xbf16>
      tpu.vector_store %arg13[%c1_107, %c0_108, %c0_109], %168 {strides = array<i32>} : memref<4x8x16xbf16, #tpu.memory_space<vmem>>, vector<1x8x16xbf16>,
      %169 = vector.extract_strided_slice %151 {offsets = [0, 8], sizes = [16, 8], strides = [1, 1]} : vector<16x32xf32> to vector<16x8xf32>
      %170 = arith.truncf %169 : vector<16x8xf32> to vector<16x8xbf16>
      %c1_110 = arith.constant 1 : index
      %c0_111 = arith.constant 0 : index
      %c0_112 = arith.constant 0 : index
      %171 = vector.load %arg14[%c1_110, %c0_111, %c0_112] : memref<4x16x8xbf16, #tpu.memory_space<vmem>>, vector<1x16x8xbf16>
      %172 = vector.shape_cast %171 : vector<1x16x8xbf16> to vector<16x8xbf16>
      %173 = vector.shape_cast %170 : vector<16x8xbf16> to vector<1x16x8xbf16>
      tpu.vector_store %arg14[%c1_110, %c0_111, %c0_112], %173 {strides = array<i32>} : memref<4x16x8xbf16, #tpu.memory_space<vmem>>, vector<1x16x8xbf16>,
      %174 = vector.extract_strided_slice %144 {offsets = [0, 16], sizes = [16, 8], strides = [1, 1]} : vector<16x32xf32> to vector<16x8xf32>
      %175 = tpu.transpose %174, [1, 0] : vector<16x8xf32> -> vector<8x16xf32>
      %176 = arith.truncf %175 : vector<8x16xf32> to vector<8x16xbf16>
      %c2_113 = arith.constant 2 : index
      %c0_114 = arith.constant 0 : index
      %c0_115 = arith.constant 0 : index
      %177 = vector.load %arg13[%c2_113, %c0_114, %c0_115] : memref<4x8x16xbf16, #tpu.memory_space<vmem>>, vector<1x8x16xbf16>
      %178 = vector.shape_cast %177 : vector<1x8x16xbf16> to vector<8x16xbf16>
      %179 = vector.shape_cast %176 : vector<8x16xbf16> to vector<1x8x16xbf16>
      tpu.vector_store %arg13[%c2_113, %c0_114, %c0_115], %179 {strides = array<i32>} : memref<4x8x16xbf16, #tpu.memory_space<vmem>>, vector<1x8x16xbf16>,
      %180 = vector.extract_strided_slice %151 {offsets = [0, 16], sizes = [16, 8], strides = [1, 1]} : vector<16x32xf32> to vector<16x8xf32>
      %181 = arith.truncf %180 : vector<16x8xf32> to vector<16x8xbf16>
      %c2_116 = arith.constant 2 : index
      %c0_117 = arith.constant 0 : index
      %c0_118 = arith.constant 0 : index
      %182 = vector.load %arg14[%c2_116, %c0_117, %c0_118] : memref<4x16x8xbf16, #tpu.memory_space<vmem>>, vector<1x16x8xbf16>
      %183 = vector.shape_cast %182 : vector<1x16x8xbf16> to vector<16x8xbf16>
      %184 = vector.shape_cast %181 : vector<16x8xbf16> to vector<1x16x8xbf16>
      tpu.vector_store %arg14[%c2_116, %c0_117, %c0_118], %184 {strides = array<i32>} : memref<4x16x8xbf16, #tpu.memory_space<vmem>>, vector<1x16x8xbf16>,
      %185 = vector.extract_strided_slice %144 {offsets = [0, 24], sizes = [16, 8], strides = [1, 1]} : vector<16x32xf32> to vector<16x8xf32>
      %186 = tpu.transpose %185, [1, 0] : vector<16x8xf32> -> vector<8x16xf32>
      %187 = arith.truncf %186 : vector<8x16xf32> to vector<8x16xbf16>
      %c3_119 = arith.constant 3 : index
      %c0_120 = arith.constant 0 : index
      %c0_121 = arith.constant 0 : index
      %188 = vector.load %arg13[%c3_119, %c0_120, %c0_121] : memref<4x8x16xbf16, #tpu.memory_space<vmem>>, vector<1x8x16xbf16>
      %189 = vector.shape_cast %188 : vector<1x8x16xbf16> to vector<8x16xbf16>
      %190 = vector.shape_cast %187 : vector<8x16xbf16> to vector<1x8x16xbf16>
      tpu.vector_store %arg13[%c3_119, %c0_120, %c0_121], %190 {strides = array<i32>} : memref<4x8x16xbf16, #tpu.memory_space<vmem>>, vector<1x8x16xbf16>,
      %191 = vector.extract_strided_slice %151 {offsets = [0, 24], sizes = [16, 8], strides = [1, 1]} : vector<16x32xf32> to vector<16x8xf32>
      %192 = arith.truncf %191 : vector<16x8xf32> to vector<16x8xbf16>
      %c3_122 = arith.constant 3 : index
      %c0_123 = arith.constant 0 : index
      %c0_124 = arith.constant 0 : index
      %193 = vector.load %arg14[%c3_122, %c0_123, %c0_124] : memref<4x16x8xbf16, #tpu.memory_space<vmem>>, vector<1x16x8xbf16>
      %194 = vector.shape_cast %193 : vector<1x16x8xbf16> to vector<16x8xbf16>
      %195 = vector.shape_cast %192 : vector<16x8xbf16> to vector<1x16x8xbf16>
      tpu.vector_store %arg14[%c3_122, %c0_123, %c0_124], %195 {strides = array<i32>} : memref<4x16x8xbf16, #tpu.memory_space<vmem>>, vector<1x16x8xbf16>,
    } else {
    }
    %c0 = arith.constant 0 : index
    %c0_1 = arith.constant 0 : index
    %c0_2 = arith.constant 0 : index
    %3 = vector.load %arg2[%c0, %c0_1, %c0_2] : memref<1x8x32xbf16, #tpu.memory_space<vmem>>, vector<1x8x32xbf16>
    %4 = vector.shape_cast %3 : vector<1x8x32xbf16> to vector<8x32xbf16>
    %c0_3 = arith.constant 0 : index
    %c0_4 = arith.constant 0 : index
    %5 = vector.load %arg6[%c0_3, %c0_4] : memref<32x32xbf16, #tpu.memory_space<vmem>>, vector<32x32xbf16>
    %cst = arith.constant dense<0.000000e+00> : vector<8x32xf32>
    %6 = tpu.matmul %4, %5, %cst {dimension_numbers = #tpu.dot_dimension_numbers<[1], [0], [0], [1], [0, 0, 1, 1], [], []>} : vector<8x32xbf16>, vector<32x32xbf16>, vector<8x32xf32> -> vector<8x32xf32>
    %c0_5 = arith.constant 0 : index
    %c0_6 = arith.constant 0 : index
    %7 = vector.load %arg10[%c0_5, %c0_6] : memref<4x32xf32, #tpu.memory_space<vmem>>, vector<1x32xf32>
    %8 = vector.broadcast %7 : vector<1x32xf32> to vector<8x32xf32>
    %9 = arith.addf %6, %8 : vector<8x32xf32>
    %cst_7 = arith.constant 0.353553385 : f32
    %10 = vector.broadcast %cst_7 : f32 to vector<8x32xf32>
    %11 = arith.mulf %9, %10 : vector<8x32xf32>
    %c0_8 = arith.constant 0 : index
    %c0_9 = arith.constant 0 : index
    %12 = vector.load %arg15[%c0_8, %c0_9] : memref<1x16xf32, #tpu.memory_space<vmem>>, vector<1x16xf32>
    %13 = vector.extract_strided_slice %11 {offsets = [0, 0], sizes = [8, 8], strides = [1, 1]} : vector<8x32xf32> to vector<8x8xf32>
    %14 = arith.truncf %13 : vector<8x8xf32> to vector<8x8xbf16>
    %c0_10 = arith.constant 0 : index
    %c0_11 = arith.constant 0 : index
    %c0_12 = arith.constant 0 : index
    %15 = vector.load %arg13[%c0_10, %c0_11, %c0_12] : memref<4x8x16xbf16, #tpu.memory_space<vmem>>, vector<1x8x16xbf16>
    %16 = vector.shape_cast %15 : vector<1x8x16xbf16> to vector<8x16xbf16>
    %cst_13 = arith.constant dense<0.000000e+00> : vector<8x16xf32>
    %17 = tpu.matmul %14, %16, %cst_13 {dimension_numbers = #tpu.dot_dimension_numbers<[1], [0], [0], [1], [0, 0, 1, 1], [], []>} : vector<8x8xbf16>, vector<8x16xbf16>, vector<8x16xf32> -> vector<8x16xf32>
    %18 = vector.broadcast %12 : vector<1x16xf32> to vector<8x16xf32>
    %19 = arith.addf %17, %18 : vector<8x16xf32>
    %cst_14 = arith.constant dense<0xFF800000> : vector<8xf32>
    %20 = vector.multi_reduction <maximumf>, %19, %cst_14 [1] : vector<8x16xf32> to vector<8xf32>
    %21 = vector.shape_cast %20 : vector<8xf32> to vector<8x1xf32>
    %22 = vector.broadcast %21 : vector<8x1xf32> to vector<8x16xf32>
    %23 = arith.subf %19, %22 : vector<8x16xf32>
    %24 = math.exp %23 : vector<8x16xf32>
    %cst_15 = arith.constant dense<0.000000e+00> : vector<8xf32>
    %25 = vector.multi_reduction <add>, %24, %cst_15 [1] : vector<8x16xf32> to vector<8xf32>
    %26 = vector.shape_cast %25 : vector<8xf32> to vector<8x1xf32>
    %27 = tpu.reciprocal %26 {approx = true} : vector<8x1xf32> -> vector<8x1xf32>
    %28 = vector.broadcast %27 : vector<8x1xf32> to vector<8x16xf32>
    %29 = arith.mulf %24, %28 : vector<8x16xf32>
    %c0_16 = arith.constant 0 : index
    %c0_17 = arith.constant 0 : index
    %c0_18 = arith.constant 0 : index
    %c0_19 = arith.constant 0 : index
    %30 = vector.load %arg12[%c0_16, %c0_17, %c0_18, %c0_19] : memref<1x4x8x16xf32, #tpu.memory_space<vmem>>, vector<1x1x8x16xf32>
    %31 = vector.shape_cast %30 : vector<1x1x8x16xf32> to vector<8x16xf32>
    %32 = vector.shape_cast %29 : vector<8x16xf32> to vector<1x1x8x16xf32>
    tpu.vector_store %arg12[%c0_16, %c0_17, %c0_18, %c0_19], %32 {strides = array<i32>} : memref<1x4x8x16xf32, #tpu.memory_space<vmem>>, vector<1x1x8x16xf32>,
    %33 = arith.truncf %29 : vector<8x16xf32> to vector<8x16xbf16>
    %c0_20 = arith.constant 0 : index
    %c0_21 = arith.constant 0 : index
    %c0_22 = arith.constant 0 : index
    %34 = vector.load %arg14[%c0_20, %c0_21, %c0_22] : memref<4x16x8xbf16, #tpu.memory_space<vmem>>, vector<1x16x8xbf16>
    %35 = vector.shape_cast %34 : vector<1x16x8xbf16> to vector<16x8xbf16>
    %cst_23 = arith.constant dense<0.000000e+00> : vector<8x8xf32>
    %36 = tpu.matmul %33, %35, %cst_23 {dimension_numbers = #tpu.dot_dimension_numbers<[1], [0], [0], [1], [0, 0, 1, 1], [], []>} : vector<8x16xbf16>, vector<16x8xbf16>, vector<8x8xf32> -> vector<8x8xf32>
    %37 = arith.truncf %36 : vector<8x8xf32> to vector<8x8xbf16>
    %c0_24 = arith.constant 0 : index
    %c0_25 = arith.constant 0 : index
    %38 = vector.load %arg9[%c0_24, %c0_25] : memref<32x32xbf16, #tpu.memory_space<vmem>>, vector<8x32xbf16>
    %cst_26 = arith.constant dense<0.000000e+00> : vector<8x32xf32>
    %39 = tpu.matmul %37, %38, %cst_26 {dimension_numbers = #tpu.dot_dimension_numbers<[1], [0], [0], [1], [0, 0, 1, 1], [], []>} : vector<8x8xbf16>, vector<8x32xbf16>, vector<8x32xf32> -> vector<8x32xf32>
    %40 = vector.extract_strided_slice %11 {offsets = [0, 8], sizes = [8, 8], strides = [1, 1]} : vector<8x32xf32> to vector<8x8xf32>
    %41 = arith.truncf %40 : vector<8x8xf32> to vector<8x8xbf16>
    %c1 = arith.constant 1 : index
    %c0_27 = arith.constant 0 : index
    %c0_28 = arith.constant 0 : index
    %42 = vector.load %arg13[%c1, %c0_27, %c0_28] : memref<4x8x16xbf16, #tpu.memory_space<vmem>>, vector<1x8x16xbf16>
    %43 = vector.shape_cast %42 : vector<1x8x16xbf16> to vector<8x16xbf16>
    %cst_29 = arith.constant dense<0.000000e+00> : vector<8x16xf32>
    %44 = tpu.matmul %41, %43, %cst_29 {dimension_numbers = #tpu.dot_dimension_numbers<[1], [0], [0], [1], [0, 0, 1, 1], [], []>} : vector<8x8xbf16>, vector<8x16xbf16>, vector<8x16xf32> -> vector<8x16xf32>
    %45 = vector.broadcast %12 : vector<1x16xf32> to vector<8x16xf32>
    %46 = arith.addf %44, %45 : vector<8x16xf32>
    %cst_30 = arith.constant dense<0xFF800000> : vector<8xf32>
    %47 = vector.multi_reduction <maximumf>, %46, %cst_30 [1] : vector<8x16xf32> to vector<8xf32>
    %48 = vector.shape_cast %47 : vector<8xf32> to vector<8x1xf32>
    %49 = vector.broadcast %48 : vector<8x1xf32> to vector<8x16xf32>
    %50 = arith.subf %46, %49 : vector<8x16xf32>
    %51 = math.exp %50 : vector<8x16xf32>
    %cst_31 = arith.constant dense<0.000000e+00> : vector<8xf32>
    %52 = vector.multi_reduction <add>, %51, %cst_31 [1] : vector<8x16xf32> to vector<8xf32>
    %53 = vector.shape_cast %52 : vector<8xf32> to vector<8x1xf32>
    %54 = tpu.reciprocal %53 {approx = true} : vector<8x1xf32> -> vector<8x1xf32>
    %55 = vector.broadcast %54 : vector<8x1xf32> to vector<8x16xf32>
    %56 = arith.mulf %51, %55 : vector<8x16xf32>
    %c0_32 = arith.constant 0 : index
    %c1_33 = arith.constant 1 : index
    %c0_34 = arith.constant 0 : index
    %c0_35 = arith.constant 0 : index
    %57 = vector.load %arg12[%c0_32, %c1_33, %c0_34, %c0_35] : memref<1x4x8x16xf32, #tpu.memory_space<vmem>>, vector<1x1x8x16xf32>
    %58 = vector.shape_cast %57 : vector<1x1x8x16xf32> to vector<8x16xf32>
    %59 = vector.shape_cast %56 : vector<8x16xf32> to vector<1x1x8x16xf32>
    tpu.vector_store %arg12[%c0_32, %c1_33, %c0_34, %c0_35], %59 {strides = array<i32>} : memref<1x4x8x16xf32, #tpu.memory_space<vmem>>, vector<1x1x8x16xf32>,
    %60 = arith.truncf %56 : vector<8x16xf32> to vector<8x16xbf16>
    %c1_36 = arith.constant 1 : index
    %c0_37 = arith.constant 0 : index
    %c0_38 = arith.constant 0 : index
    %61 = vector.load %arg14[%c1_36, %c0_37, %c0_38] : memref<4x16x8xbf16, #tpu.memory_space<vmem>>, vector<1x16x8xbf16>
    %62 = vector.shape_cast %61 : vector<1x16x8xbf16> to vector<16x8xbf16>
    %cst_39 = arith.constant dense<0.000000e+00> : vector<8x8xf32>
    %63 = tpu.matmul %60, %62, %cst_39 {dimension_numbers = #tpu.dot_dimension_numbers<[1], [0], [0], [1], [0, 0, 1, 1], [], []>} : vector<8x16xbf16>, vector<16x8xbf16>, vector<8x8xf32> -> vector<8x8xf32>
    %64 = arith.truncf %63 : vector<8x8xf32> to vector<8x8xbf16>
    %c8 = arith.constant 8 : index
    %c0_40 = arith.constant 0 : index
    %65 = vector.load %arg9[%c8, %c0_40] : memref<32x32xbf16, #tpu.memory_space<vmem>>, vector<8x32xbf16>
    %cst_41 = arith.constant dense<0.000000e+00> : vector<8x32xf32>
    %66 = tpu.matmul %64, %65, %cst_41 {dimension_numbers = #tpu.dot_dimension_numbers<[1], [0], [0], [1], [0, 0, 1, 1], [], []>} : vector<8x8xbf16>, vector<8x32xbf16>, vector<8x32xf32> -> vector<8x32xf32>
    %67 = arith.addf %39, %66 : vector<8x32xf32>
    %68 = vector.extract_strided_slice %11 {offsets = [0, 16], sizes = [8, 8], strides = [1, 1]} : vector<8x32xf32> to vector<8x8xf32>
    %69 = arith.truncf %68 : vector<8x8xf32> to vector<8x8xbf16>
    %c2 = arith.constant 2 : index
    %c0_42 = arith.constant 0 : index
    %c0_43 = arith.constant 0 : index
    %70 = vector.load %arg13[%c2, %c0_42, %c0_43] : memref<4x8x16xbf16, #tpu.memory_space<vmem>>, vector<1x8x16xbf16>
    %71 = vector.shape_cast %70 : vector<1x8x16xbf16> to vector<8x16xbf16>
    %cst_44 = arith.constant dense<0.000000e+00> : vector<8x16xf32>
    %72 = tpu.matmul %69, %71, %cst_44 {dimension_numbers = #tpu.dot_dimension_numbers<[1], [0], [0], [1], [0, 0, 1, 1], [], []>} : vector<8x8xbf16>, vector<8x16xbf16>, vector<8x16xf32> -> vector<8x16xf32>
    %73 = vector.broadcast %12 : vector<1x16xf32> to vector<8x16xf32>
    %74 = arith.addf %72, %73 : vector<8x16xf32>
    %cst_45 = arith.constant dense<0xFF800000> : vector<8xf32>
    %75 = vector.multi_reduction <maximumf>, %74, %cst_45 [1] : vector<8x16xf32> to vector<8xf32>
    %76 = vector.shape_cast %75 : vector<8xf32> to vector<8x1xf32>
    %77 = vector.broadcast %76 : vector<8x1xf32> to vector<8x16xf32>
    %78 = arith.subf %74, %77 : vector<8x16xf32>
    %79 = math.exp %78 : vector<8x16xf32>
    %cst_46 = arith.constant dense<0.000000e+00> : vector<8xf32>
    %80 = vector.multi_reduction <add>, %79, %cst_46 [1] : vector<8x16xf32> to vector<8xf32>
    %81 = vector.shape_cast %80 : vector<8xf32> to vector<8x1xf32>
    %82 = tpu.reciprocal %81 {approx = true} : vector<8x1xf32> -> vector<8x1xf32>
    %83 = vector.broadcast %82 : vector<8x1xf32> to vector<8x16xf32>
    %84 = arith.mulf %79, %83 : vector<8x16xf32>
    %c0_47 = arith.constant 0 : index
    %c2_48 = arith.constant 2 : index
    %c0_49 = arith.constant 0 : index
    %c0_50 = arith.constant 0 : index
    %85 = vector.load %arg12[%c0_47, %c2_48, %c0_49, %c0_50] : memref<1x4x8x16xf32, #tpu.memory_space<vmem>>, vector<1x1x8x16xf32>
    %86 = vector.shape_cast %85 : vector<1x1x8x16xf32> to vector<8x16xf32>
    %87 = vector.shape_cast %84 : vector<8x16xf32> to vector<1x1x8x16xf32>
    tpu.vector_store %arg12[%c0_47, %c2_48, %c0_49, %c0_50], %87 {strides = array<i32>} : memref<1x4x8x16xf32, #tpu.memory_space<vmem>>, vector<1x1x8x16xf32>,
    %88 = arith.truncf %84 : vector<8x16xf32> to vector<8x16xbf16>
    %c2_51 = arith.constant 2 : index
    %c0_52 = arith.constant 0 : index
    %c0_53 = arith.constant 0 : index
    %89 = vector.load %arg14[%c2_51, %c0_52, %c0_53] : memref<4x16x8xbf16, #tpu.memory_space<vmem>>, vector<1x16x8xbf16>
    %90 = vector.shape_cast %89 : vector<1x16x8xbf16> to vector<16x8xbf16>
    %cst_54 = arith.constant dense<0.000000e+00> : vector<8x8xf32>
    %91 = tpu.matmul %88, %90, %cst_54 {dimension_numbers = #tpu.dot_dimension_numbers<[1], [0], [0], [1], [0, 0, 1, 1], [], []>} : vector<8x16xbf16>, vector<16x8xbf16>, vector<8x8xf32> -> vector<8x8xf32>
    %92 = arith.truncf %91 : vector<8x8xf32> to vector<8x8xbf16>
    %c16 = arith.constant 16 : index
    %c0_55 = arith.constant 0 : index
    %93 = vector.load %arg9[%c16, %c0_55] : memref<32x32xbf16, #tpu.memory_space<vmem>>, vector<8x32xbf16>
    %cst_56 = arith.constant dense<0.000000e+00> : vector<8x32xf32>
    %94 = tpu.matmul %92, %93, %cst_56 {dimension_numbers = #tpu.dot_dimension_numbers<[1], [0], [0], [1], [0, 0, 1, 1], [], []>} : vector<8x8xbf16>, vector<8x32xbf16>, vector<8x32xf32> -> vector<8x32xf32>
    %95 = arith.addf %67, %94 : vector<8x32xf32>
    %96 = vector.extract_strided_slice %11 {offsets = [0, 24], sizes = [8, 8], strides = [1, 1]} : vector<8x32xf32> to vector<8x8xf32>
    %97 = arith.truncf %96 : vector<8x8xf32> to vector<8x8xbf16>
    %c3 = arith.constant 3 : index
    %c0_57 = arith.constant 0 : index
    %c0_58 = arith.constant 0 : index
    %98 = vector.load %arg13[%c3, %c0_57, %c0_58] : memref<4x8x16xbf16, #tpu.memory_space<vmem>>, vector<1x8x16xbf16>
    %99 = vector.shape_cast %98 : vector<1x8x16xbf16> to vector<8x16xbf16>
    %cst_59 = arith.constant dense<0.000000e+00> : vector<8x16xf32>
    %100 = tpu.matmul %97, %99, %cst_59 {dimension_numbers = #tpu.dot_dimension_numbers<[1], [0], [0], [1], [0, 0, 1, 1], [], []>} : vector<8x8xbf16>, vector<8x16xbf16>, vector<8x16xf32> -> vector<8x16xf32>
    %101 = vector.broadcast %12 : vector<1x16xf32> to vector<8x16xf32>
    %102 = arith.addf %100, %101 : vector<8x16xf32>
    %cst_60 = arith.constant dense<0xFF800000> : vector<8xf32>
    %103 = vector.multi_reduction <maximumf>, %102, %cst_60 [1] : vector<8x16xf32> to vector<8xf32>
    %104 = vector.shape_cast %103 : vector<8xf32> to vector<8x1xf32>
    %105 = vector.broadcast %104 : vector<8x1xf32> to vector<8x16xf32>
    %106 = arith.subf %102, %105 : vector<8x16xf32>
    %107 = math.exp %106 : vector<8x16xf32>
    %cst_61 = arith.constant dense<0.000000e+00> : vector<8xf32>
    %108 = vector.multi_reduction <add>, %107, %cst_61 [1] : vector<8x16xf32> to vector<8xf32>
    %109 = vector.shape_cast %108 : vector<8xf32> to vector<8x1xf32>
    %110 = tpu.reciprocal %109 {approx = true} : vector<8x1xf32> -> vector<8x1xf32>
    %111 = vector.broadcast %110 : vector<8x1xf32> to vector<8x16xf32>
    %112 = arith.mulf %107, %111 : vector<8x16xf32>
    %c0_62 = arith.constant 0 : index
    %c3_63 = arith.constant 3 : index
    %c0_64 = arith.constant 0 : index
    %c0_65 = arith.constant 0 : index
    %113 = vector.load %arg12[%c0_62, %c3_63, %c0_64, %c0_65] : memref<1x4x8x16xf32, #tpu.memory_space<vmem>>, vector<1x1x8x16xf32>
    %114 = vector.shape_cast %113 : vector<1x1x8x16xf32> to vector<8x16xf32>
    %115 = vector.shape_cast %112 : vector<8x16xf32> to vector<1x1x8x16xf32>
    tpu.vector_store %arg12[%c0_62, %c3_63, %c0_64, %c0_65], %115 {strides = array<i32>} : memref<1x4x8x16xf32, #tpu.memory_space<vmem>>, vector<1x1x8x16xf32>,
    %116 = arith.truncf %112 : vector<8x16xf32> to vector<8x16xbf16>
    %c3_66 = arith.constant 3 : index
    %c0_67 = arith.constant 0 : index
    %c0_68 = arith.constant 0 : index
    %117 = vector.load %arg14[%c3_66, %c0_67, %c0_68] : memref<4x16x8xbf16, #tpu.memory_space<vmem>>, vector<1x16x8xbf16>
    %118 = vector.shape_cast %117 : vector<1x16x8xbf16> to vector<16x8xbf16>
    %cst_69 = arith.constant dense<0.000000e+00> : vector<8x8xf32>
    %119 = tpu.matmul %116, %118, %cst_69 {dimension_numbers = #tpu.dot_dimension_numbers<[1], [0], [0], [1], [0, 0, 1, 1], [], []>} : vector<8x16xbf16>, vector<16x8xbf16>, vector<8x8xf32> -> vector<8x8xf32>
    %120 = arith.truncf %119 : vector<8x8xf32> to vector<8x8xbf16>
    %c24 = arith.constant 24 : index
    %c0_70 = arith.constant 0 : index
    %121 = vector.load %arg9[%c24, %c0_70] : memref<32x32xbf16, #tpu.memory_space<vmem>>, vector<8x32xbf16>
    %cst_71 = arith.constant dense<0.000000e+00> : vector<8x32xf32>
    %122 = tpu.matmul %120, %121, %cst_71 {dimension_numbers = #tpu.dot_dimension_numbers<[1], [0], [0], [1], [0, 0, 1, 1], [], []>} : vector<8x8xbf16>, vector<8x32xbf16>, vector<8x32xf32> -> vector<8x32xf32>
    %123 = arith.addf %95, %122 : vector<8x32xf32>
    %c3_72 = arith.constant 3 : index
    %c0_73 = arith.constant 0 : index
    %124 = vector.load %arg10[%c3_72, %c0_73] : memref<4x32xf32, #tpu.memory_space<vmem>>, vector<1x32xf32>
    %125 = vector.broadcast %124 : vector<1x32xf32> to vector<8x32xf32>
    %126 = arith.addf %123, %125 : vector<8x32xf32>
    %c0_74 = arith.constant 0 : index
    %c0_75 = arith.constant 0 : index
    %c0_76 = arith.constant 0 : index
    %127 = vector.load %arg11[%c0_74, %c0_75, %c0_76] : memref<1x8x32xf32, #tpu.memory_space<vmem>>, vector<1x8x32xf32>
    %128 = vector.shape_cast %127 : vector<1x8x32xf32> to vector<8x32xf32>
    %129 = vector.shape_cast %126 : vector<8x32xf32> to vector<1x8x32xf32>
    tpu.vector_store %arg11[%c0_74, %c0_75, %c0_76], %129 {strides = array<i32>} : memref<1x8x32xf32, #tpu.memory_space<vmem>>, vector<1x8x32xf32>,
    return
  }
  func.func @transform_0(%arg0: i32, %arg1: i32) -> (i32, i32, i32) {
    %c0_i32 = arith.constant 0 : i32
    %c0_i32_0 = arith.constant 0 : i32
    return %arg0, %arg1, %c0_i32 : i32, i32, i32
  }
  func.func @transform_1(%arg0: i32, %arg1: i32) -> (i32, i32, i32) {
    %c0_i32 = arith.constant 0 : i32
    %c0_i32_0 = arith.constant 0 : i32
    %c0_i32_1 = arith.constant 0 : i32
    return %arg0, %c0_i32, %c0_i32_0 : i32, i32, i32
  }
  func.func @transform_2(%arg0: i32, %arg1: i32) -> (i32, i32, i32) {
    %c0_i32 = arith.constant 0 : i32
    %c0_i32_0 = arith.constant 0 : i32
    %c0_i32_1 = arith.constant 0 : i32
    return %arg0, %c0_i32, %c0_i32_0 : i32, i32, i32
  }
  func.func @transform_3(%arg0: i32, %arg1: i32) -> (i32, i32, i32) {
    %c0_i32 = arith.constant 0 : i32
    %c0_i32_0 = arith.constant 0 : i32
    %c0_i32_1 = arith.constant 0 : i32
    return %arg0, %c0_i32, %c0_i32_0 : i32, i32, i32
  }
  func.func @transform_4(%arg0: i32, %arg1: i32) -> (i32, i32) {
    %c0_i32 = arith.constant 0 : i32
    %c0_i32_0 = arith.constant 0 : i32
    %c0_i32_1 = arith.constant 0 : i32
    return %c0_i32, %c0_i32_0 : i32, i32
  }
  func.func @transform_5(%arg0: i32, %arg1: i32) -> (i32, i32) {
    %c0_i32 = arith.constant 0 : i32
    %c0_i32_0 = arith.constant 0 : i32
    %c0_i32_1 = arith.constant 0 : i32
    return %c0_i32, %c0_i32_0 : i32, i32
  }
  func.func @transform_6(%arg0: i32, %arg1: i32) -> (i32, i32) {
    %c0_i32 = arith.constant 0 : i32
    %c0_i32_0 = arith.constant 0 : i32
    %c0_i32_1 = arith.constant 0 : i32
    return %c0_i32, %c0_i32_0 : i32, i32
  }
  func.func @transform_7(%arg0: i32, %arg1: i32) -> (i32, i32) {
    %c0_i32 = arith.constant 0 : i32
    %c0_i32_0 = arith.constant 0 : i32
    %c0_i32_1 = arith.constant 0 : i32
    return %c0_i32, %c0_i32_0 : i32, i32
  }
  func.func @transform_8(%arg0: i32, %arg1: i32) -> (i32, i32) {
    %c0_i32 = arith.constant 0 : i32
    %c0_i32_0 = arith.constant 0 : i32
    %c0_i32_1 = arith.constant 0 : i32
    return %c0_i32, %c0_i32_0 : i32, i32
  }
  func.func @transform_9(%arg0: i32, %arg1: i32) -> (i32, i32, i32) {
    %c0_i32 = arith.constant 0 : i32
    %c0_i32_0 = arith.constant 0 : i32
    return %arg0, %arg1, %c0_i32 : i32, i32, i32
  }
  func.func @transform_10(%arg0: i32, %arg1: i32) -> (i32, i32, i32, i32) {
    %c0_i32 = arith.constant 0 : i32
    %c0_i32_0 = arith.constant 0 : i32
    %c0_i32_1 = arith.constant 0 : i32
    return %arg0, %c0_i32, %arg1, %c0_i32_0 : i32, i32, i32, i32
  }
}

</mosaic_0001>

<llo_original>
// kernel: tpu_custom_call.1
$region0: #{tpu_custom_call.1}
  #allocation0 [shape = 'u32[]', space=smem, size = 0x4, offset = 0x4, fixed_abs, tag = 'smem constant byte address 0x4 - core index']
  #allocation1 [shape = 'u32[144,128]{1,0:T(1,128)}', space=vmem, size = 0x12000, scoped, tag = 'internal scratch']
  #allocation2 [shape = 'bf16[4,8,16]{2,1,0:T(8,128)(2,1)}', space=vmem, size = 0x2000, scoped, tag = 'scratch operand']
  #allocation3 [shape = 'bf16[4,16,8]{2,1,0:T(16,128)(2,1)}', space=vmem, size = 0x4000, scoped, tag = 'scratch operand']
  #allocation4 [shape = 'f32[1,16]{1,0:T(1,128)}', space=vmem, size = 0x200, scoped, tag = 'scratch operand']
  %s0 = inlined_call_operand.hbm [shape: bf16[2,16,32], index: 0, kind: input, shape index: {}]
  %s1 = inlined_call_operand.hbm [shape: bf16[2,16,32], index: 1, kind: input, shape index: {}]
  %s2 = inlined_call_operand.hbm [shape: bf16[2,16,32], index: 2, kind: input, shape index: {}]
  %s3 = inlined_call_operand.vmem [shape: f32[2,1,16], index: 3, kind: input, shape index: {}]
  %s4 = inlined_call_operand.hbm [shape: bf16[32,32], index: 4, kind: input, shape index: {}]
  %s5 = inlined_call_operand.vmem [shape: bf16[32,32], index: 5, kind: input, shape index: {}]
  %s6 = inlined_call_operand.hbm [shape: bf16[32,32], index: 6, kind: input, shape index: {}]
  %s7 = inlined_call_operand.hbm [shape: bf16[32,32], index: 7, kind: input, shape index: {}]
  %s8 = inlined_call_operand.vmem [shape: f32[4,32], index: 8, kind: input, shape index: {}]
  %s9 = inlined_call_operand.hbm [shape: f32[2,16,32], index: 9, kind: output, shape index: {0}]
  %s10 = inlined_call_operand.hbm [shape: f32[2,4,16,16], index: 10, kind: output, shape index: {1}]
  %11 = xla_tuple %s9, %s10
  %s12 = sld [smem:[#allocation0]]
  $region105: #{tpu_custom_call.1} parent=0
    _
  %s14 = ssub.s32 1, %s12
  %s15 = scalar_select 0, %s14, %s12
  $region1: #{tpu_custom_call.1} parent=0
    #allocation5 [shape = 'u8[4096]{0}', space=vmem, size = 0x1000, scoped, tag = 'input window, operand 0']
    #allocation6 [shape = 's32[2]{0}', space=sflag, size = 0x8, scoped, tag = 'scoped memory for tpu_custom_call.1']
    #allocation7 [shape = 's32[2]{0}', space=sflag, size = 0x8, scoped, tag = 'scoped memory for tpu_custom_call.1']
    #allocation8 [shape = 'u8[8192]{0}', space=vmem, size = 0x2000, scoped, tag = 'input window, operand 1']
    #allocation9 [shape = 's32[2]{0}', space=sflag, size = 0x8, scoped, tag = 'scoped memory for tpu_custom_call.1']
    #allocation10 [shape = 'u8[8192]{0}', space=vmem, size = 0x2000, scoped, tag = 'input window, operand 2']
    #allocation11 [shape = 'u8[8192]{0}', space=vmem, size = 0x2000, scoped, tag = 'input window, operand 4, single buffered']
    #allocation12 [shape = 's32[1]{0}', space=sflag, size = 0x4, scoped, tag = 'scoped memory for tpu_custom_call.1']
    #allocation13 [shape = 'u8[8192]{0}', space=vmem, size = 0x2000, scoped, tag = 'input window, operand 6, single buffered']
    #allocation14 [shape = 'u8[8192]{0}', space=vmem, size = 0x2000, scoped, tag = 'input window, operand 7, single buffered']
    #allocation15 [shape = 's32[1]{0}', space=sflag, size = 0x4, scoped, tag = 'scoped memory for tpu_custom_call.1']
    #allocation16 [shape = 'u8[8192]{0}', space=vmem, size = 0x2000, scoped, tag = 'output window, operand 0']
    #allocation17 [shape = 'u8[32768]{0}', space=vmem, size = 0x8000, scoped, tag = 'output window, operand 1']
    #allocation18 [shape = 's32[2]{0}', space=sflag, size = 0x8, scoped, tag = 'scoped memory for tpu_custom_call.1']
    %16 = vsyncpa [#allocation6], 0
    %s17 = scalar_lea.sflag [#allocation6], 1
    %18 = vsyncpa %s17, 0
    %19 = vsyncpa [#allocation9], 0
    %s20 = scalar_lea.sflag [#allocation9], 1
    %21 = vsyncpa %s20, 0
    %22 = vsyncpa [#allocation12], 0
    %23 = vsyncpa [#allocation15], 0
    %24 = vsyncpa [#allocation7], 0
    %s25 = scalar_lea.sflag [#allocation7], 1
    %26 = vsyncpa %s25, 0
    %27 = vsyncpa [#allocation18], 0
    %s28 = scalar_lea.sflag [#allocation18], 1
    %29 = vsyncpa %s28, 0
    loop: start=0, step=1, limit=6
    $region2: #{tpu_custom_call.1} parent=1 // loop_pre_header
      _
    $region3: #{tpu_custom_call.1} parent=1 // loop_header
      %s31 = sphi 0, %s35
      %p32 = scmp.ge.s32.totalorder %s31, 6
      %s38 = sphi 0, %s50
      %s39 = sphi 0, %s46
      %s40 = sphi 0, %s38
      %s41 = sphi 0, %s39
      %s42 = sphi 0, %s40
      %s43 = sphi 0, %s41
      %s55 = sphi 0, %s57
      %s58 = sphi 0, %s55
      %s59 = sphi 0, %s58
      %s75 = sphi 0, %s59
      %s81 = sphi 0, %s83
      %s84 = sphi 0, %s81
      %s85 = sphi 0, %s84
      %s101 = sphi 0, %s85
      %s107 = sphi 0, %s109
      %s110 = sphi 0, %s107
      %s111 = sphi 0, %s110
      %s127 = sphi 0, %s111
      %s133 = sphi 0, %s135
      %s136 = sphi 0, %s133
      %s137 = sphi 0, %s136
      %s153 = sphi 0, %s137
      %s157 = sphi 0, %s157
      %s159 = sphi 0, %s157
      %s160 = sphi 0, %s159
      %s174 = sphi 0, %s160
      %s178 = sphi 0, %s178
      %s180 = sphi 0, %s178
      %s181 = sphi 0, %s180
      %s195 = sphi 0, %s181
      %s199 = sphi 0, %s199
      %s201 = sphi 0, %s199
      %s202 = sphi 0, %s201
      %s216 = sphi 0, %s202
      %s220 = sphi 0, %s220
      %s222 = sphi 0, %s220
      %s223 = sphi 0, %s222
      %s237 = sphi 0, %s223
      %s241 = sphi 0, %s241
      %s243 = sphi 0, %s241
      %s244 = sphi 0, %s243
      %s258 = sphi 0, %s244
      %s266 = sphi 0, %s268
      %s269 = sphi 0, %s266
      %s270 = sphi 0, %s269
      %s286 = sphi 0, %s270
      %s294 = sphi 0, %s296
      %s297 = sphi 0, %s294
      %s298 = sphi 0, %s297
      %s314 = sphi 0, %s298
    $region4: #{tpu_custom_call.1} parent=1 // loop_header_branch
      %34 = sbr.rel (%p32) target = $region8
    $region5: #{tpu_custom_call.1} parent=1 // loop_body
      %s36 = ssub.s32 %s31, 1
      %s37 = ssub.s32 %s31, 2
      %s44 = sadd.s32 1, %s39
      %p45 = scmp.ge.s32.totalorder %s44, 2
      %s46 = scalar_select %p45, 0, %s44
      %s47 = sadd.s32 1, %s38
      %s48 = scalar_select %p45, %s47, %s38
      %p49 = scmp.ge.s32.totalorder %s48, 2
      %s50 = scalar_select %p49, 0, %s48
      %s51 = ssub.s32 %s38, %s50
      %s52 = ssub.s32 %s39, %s46
      %s53 = sor.u32 %s51, %s52
      %p54 = scmp.eq.s32.totalorder %s53, 0
      %s56 = sadd.s32 %s55, 1
      %s57 = scalar_select %p54, %s55, %s56
      %p60 = pneg %p54
      %p61 = scmp.eq.s32.totalorder %s31, 3
      %p62 = por %p60, %p61
      %p63 = scmp.ne.s32.totalorder %s55, %s58
      %p64 = scmp.eq.s32.totalorder %s31, 0
      %p65 = por %p63, %p64
      %p66 = scmp.ne.s32.totalorder %s55, %s58
      %p67 = scmp.eq.s32.totalorder %s36, 3
      %p68 = por %p66, %p67
      %p69 = scmp.ne.s32.totalorder %s58, %s59
      %p70 = scmp.eq.s32.totalorder %s36, 0
      %p71 = por %p69, %p70
      %p72 = scmp.ne.s32.totalorder %s58, %s59
      %p73 = scmp.eq.s32.totalorder %s37, 3
      %p74 = por %p72, %p73
      %p76 = scmp.ne.s32.totalorder %s59, %s75
      %p77 = scmp.eq.s32.totalorder %s37, 0
      %p78 = por %p76, %p77
      %s79 = ssub.s32 %s38, %s50
      %p80 = scmp.eq.s32.totalorder %s79, 0
      %s82 = sadd.s32 %s81, 1
      %s83 = scalar_select %p80, %s81, %s82
      %p86 = pneg %p80
      %p87 = scmp.eq.s32.totalorder %s31, 3
      %p88 = por %p86, %p87
      %p89 = scmp.ne.s32.totalorder %s81, %s84
      %p90 = scmp.eq.s32.totalorder %s31, 0
      %p91 = por %p89, %p90
      %p92 = scmp.ne.s32.totalorder %s81, %s84
      %p93 = scmp.eq.s32.totalorder %s36, 3
      %p94 = por %p92, %p93
      %p95 = scmp.ne.s32.totalorder %s84, %s85
      %p96 = scmp.eq.s32.totalorder %s36, 0
      %p97 = por %p95, %p96
      %p98 = scmp.ne.s32.totalorder %s84, %s85
      %p99 = scmp.eq.s32.totalorder %s37, 3
      %p100 = por %p98, %p99
      %p102 = scmp.ne.s32.totalorder %s85, %s101
      %p103 = scmp.eq.s32.totalorder %s37, 0
      %p104 = por %p102, %p103
      %s105 = ssub.s32 %s38, %s50
      %p106 = scmp.eq.s32.totalorder %s105, 0
      %s108 = sadd.s32 %s107, 1
      %s109 = scalar_select %p106, %s107, %s108
      %p112 = pneg %p106
      %p113 = scmp.eq.s32.totalorder %s31, 3
      %p114 = por %p112, %p113
      %p115 = scmp.ne.s32.totalorder %s107, %s110
      %p116 = scmp.eq.s32.totalorder %s31, 0
      %p117 = por %p115, %p116
      %p118 = scmp.ne.s32.totalorder %s107, %s110
      %p119 = scmp.eq.s32.totalorder %s36, 3
      %p120 = por %p118, %p119
      %p121 = scmp.ne.s32.totalorder %s110, %s111
      %p122 = scmp.eq.s32.totalorder %s36, 0
      %p123 = por %p121, %p122
      %p124 = scmp.ne.s32.totalorder %s110, %s111
      %p125 = scmp.eq.s32.totalorder %s37, 3
      %p126 = por %p124, %p125
      %p128 = scmp.ne.s32.totalorder %s111, %s127
      %p129 = scmp.eq.s32.totalorder %s37, 0
      %p130 = por %p128, %p129
      %s131 = ssub.s32 %s38, %s50
      %p132 = scmp.eq.s32.totalorder %s131, 0
      %s134 = sadd.s32 %s133, 1
      %s135 = scalar_select %p132, %s133, %s134
      %p138 = pneg %p132
      %p139 = scmp.eq.s32.totalorder %s31, 3
      %p140 = por %p138, %p139
      %p141 = scmp.ne.s32.totalorder %s133, %s136
      %p142 = scmp.eq.s32.totalorder %s31, 0
      %p143 = por %p141, %p142
      %p144 = scmp.ne.s32.totalorder %s133, %s136
      %p145 = scmp.eq.s32.totalorder %s36, 3
      %p146 = por %p144, %p145
      %p147 = scmp.ne.s32.totalorder %s136, %s137
      %p148 = scmp.eq.s32.totalorder %s36, 0
      %p149 = por %p147, %p148
      %p150 = scmp.ne.s32.totalorder %s136, %s137
      %p151 = scmp.eq.s32.totalorder %s37, 3
      %p152 = por %p150, %p151
      %p154 = scmp.ne.s32.totalorder %s137, %s153
      %p155 = scmp.eq.s32.totalorder %s37, 0
      %p156 = por %p154, %p155
      %s158 = sadd.s32 %s157, 1
      %p161 = scmp.eq.s32.totalorder %s31, 3
      %p162 = scmp.ne.s32.totalorder %s157, %s159
      %p163 = scmp.eq.s32.totalorder %s31, 0
      %p164 = por %p162, %p163
      %p165 = scmp.ne.s32.totalorder %s157, %s159
      %p166 = scmp.eq.s32.totalorder %s36, 3
      %p167 = por %p165, %p166
      %p168 = scmp.ne.s32.totalorder %s159, %s160
      %p169 = scmp.eq.s32.totalorder %s36, 0
      %p170 = por %p168, %p169
      %p171 = scmp.ne.s32.totalorder %s159, %s160
      %p172 = scmp.eq.s32.totalorder %s37, 3
      %p173 = por %p171, %p172
      %p175 = scmp.ne.s32.totalorder %s160, %s174
      %p176 = scmp.eq.s32.totalorder %s37, 0
      %p177 = por %p175, %p176
      %s179 = sadd.s32 %s178, 1
      %p182 = scmp.eq.s32.totalorder %s31, 3
      %p183 = scmp.ne.s32.totalorder %s178, %s180
      %p184 = scmp.eq.s32.totalorder %s31, 0
      %p185 = por %p183, %p184
      %p186 = scmp.ne.s32.totalorder %s178, %s180
      %p187 = scmp.eq.s32.totalorder %s36, 3
      %p188 = por %p186, %p187
      %p189 = scmp.ne.s32.totalorder %s180, %s181
      %p190 = scmp.eq.s32.totalorder %s36, 0
      %p191 = por %p189, %p190
      %p192 = scmp.ne.s32.totalorder %s180, %s181
      %p193 = scmp.eq.s32.totalorder %s37, 3
      %p194 = por %p192, %p193
      %p196 = scmp.ne.s32.totalorder %s181, %s195
      %p197 = scmp.eq.s32.totalorder %s37, 0
      %p198 = por %p196, %p197
      %s200 = sadd.s32 %s199, 1
      %p203 = scmp.eq.s32.totalorder %s31, 3
      %p204 = scmp.ne.s32.totalorder %s199, %s201
      %p205 = scmp.eq.s32.totalorder %s31, 0
      %p206 = por %p204, %p205
      %p207 = scmp.ne.s32.totalorder %s199, %s201
      %p208 = scmp.eq.s32.totalorder %s36, 3
      %p209 = por %p207, %p208
      %p210 = scmp.ne.s32.totalorder %s201, %s202
      %p211 = scmp.eq.s32.totalorder %s36, 0
      %p212 = por %p210, %p211
      %p213 = scmp.ne.s32.totalorder %s201, %s202
      %p214 = scmp.eq.s32.totalorder %s37, 3
      %p215 = por %p213, %p214
      %p217 = scmp.ne.s32.totalorder %s202, %s216
      %p218 = scmp.eq.s32.totalorder %s37, 0
      %p219 = por %p217, %p218
      %s221 = sadd.s32 %s220, 1
      %p224 = scmp.eq.s32.totalorder %s31, 3
      %p225 = scmp.ne.s32.totalorder %s220, %s222
      %p226 = scmp.eq.s32.totalorder %s31, 0
      %p227 = por %p225, %p226
      %p228 = scmp.ne.s32.totalorder %s220, %s222
      %p229 = scmp.eq.s32.totalorder %s36, 3
      %p230 = por %p228, %p229
      %p231 = scmp.ne.s32.totalorder %s222, %s223
      %p232 = scmp.eq.s32.totalorder %s36, 0
      %p233 = por %p231, %p232
      %p234 = scmp.ne.s32.totalorder %s222, %s223
      %p235 = scmp.eq.s32.totalorder %s37, 3
      %p236 = por %p234, %p235
      %p238 = scmp.ne.s32.totalorder %s223, %s237
      %p239 = scmp.eq.s32.totalorder %s37, 0
      %p240 = por %p238, %p239
      %s242 = sadd.s32 %s241, 1
      %p245 = scmp.eq.s32.totalorder %s31, 3
      %p246 = scmp.ne.s32.totalorder %s241, %s243
      %p247 = scmp.eq.s32.totalorder %s31, 0
      %p248 = por %p246, %p247
      %p249 = scmp.ne.s32.totalorder %s241, %s243
      %p250 = scmp.eq.s32.totalorder %s36, 3
      %p251 = por %p249, %p250
      %p252 = scmp.ne.s32.totalorder %s243, %s244
      %p253 = scmp.eq.s32.totalorder %s36, 0
      %p254 = por %p252, %p253
      %p255 = scmp.ne.s32.totalorder %s243, %s244
      %p256 = scmp.eq.s32.totalorder %s37, 3
      %p257 = por %p255, %p256
      %p259 = scmp.ne.s32.totalorder %s244, %s258
      %p260 = scmp.eq.s32.totalorder %s37, 0
      %p261 = por %p259, %p260
      %s262 = ssub.s32 %s38, %s50
      %s263 = ssub.s32 %s39, %s46
      %s264 = sor.u32 %s262, %s263
      %p265 = scmp.eq.s32.totalorder %s264, 0
      %s267 = sadd.s32 %s266, 1
      %s268 = scalar_select %p265, %s266, %s267
      %p271 = pneg %p265
      %p272 = scmp.eq.s32.totalorder %s31, 3
      %p273 = por %p271, %p272
      %p274 = scmp.ne.s32.totalorder %s266, %s269
      %p275 = scmp.eq.s32.totalorder %s31, 0
      %p276 = por %p274, %p275
      %p277 = scmp.ne.s32.totalorder %s266, %s269
      %p278 = scmp.eq.s32.totalorder %s36, 3
      %p279 = por %p277, %p278
      %p280 = scmp.ne.s32.totalorder %s269, %s270
      %p281 = scmp.eq.s32.totalorder %s36, 0
      %p282 = por %p280, %p281
      %p283 = scmp.ne.s32.totalorder %s269, %s270
      %p284 = scmp.eq.s32.totalorder %s37, 3
      %p285 = por %p283, %p284
      %p287 = scmp.ne.s32.totalorder %s270, %s286
      %p288 = scmp.eq.s32.totalorder %s37, 0
      %p289 = por %p287, %p288
      %s290 = ssub.s32 %s38, %s50
      %s291 = ssub.s32 %s39, %s46
      %s292 = sor.u32 %s290, %s291
      %p293 = scmp.eq.s32.totalorder %s292, 0
      %s295 = sadd.s32 %s294, 1
      %s296 = scalar_select %p293, %s294, %s295
      %p299 = pneg %p293
      %p300 = scmp.eq.s32.totalorder %s31, 3
      %p301 = por %p299, %p300
      %p302 = scmp.ne.s32.totalorder %s294, %s297
      %p303 = scmp.eq.s32.totalorder %s31, 0
      %p304 = por %p302, %p303
      %p305 = scmp.ne.s32.totalorder %s294, %s297
      %p306 = scmp.eq.s32.totalorder %s36, 3
      %p307 = por %p305, %p306
      %p308 = scmp.ne.s32.totalorder %s297, %s298
      %p309 = scmp.eq.s32.totalorder %s36, 0
      %p310 = por %p308, %p309
      %p311 = scmp.ne.s32.totalorder %s297, %s298
      %p312 = scmp.eq.s32.totalorder %s37, 3
      %p313 = por %p311, %p312
      %p315 = scmp.ne.s32.totalorder %s298, %s314
      %p316 = scmp.eq.s32.totalorder %s37, 0
      %p317 = por %p315, %p316
      %p318 = scmp.le.s32.totalorder 1, %s31
      %p319 = scmp.lt.s32.totalorder %s31, 5
      %p320 = pnand %p318, %p319
      %p321 = pneg %p320
      // Predicated region
      $region9: #{tpu_custom_call.1} parent=5 // pred_check
        _
      $region10: #{tpu_custom_call.1} parent=5 // pred_check_branch
        %323 = sbr.rel (%p320) target = $region12
      $region11: #{tpu_custom_call.1} parent=5 // pred_region
        %s324 = ssub.s32 %s31, 1
        // Predicated region
        $region13: #{tpu_custom_call.1} parent=11 // pred_check
          %p325 = pneg %p170
        $region14: #{tpu_custom_call.1} parent=11 // pred_check_branch
          %327 = sbr.rel (%p325) target = $region16
        $region15: #{tpu_custom_call.1} parent=11 // pred_region
          %s329 = ssub.s32 256, 256
          %330 = vsyncadd [#allocation12], %s329
          %s331 = sshll.u32 [#allocation11], 4
          %s332 = int_to_ptr.vmem [resolvable:$true] %s331
          %337 = dma.hbm_to_vmem [thread:$0]  %s4, 256, %s332, [#allocation12], 64, 64, 4
        $region16: #{tpu_custom_call.1} parent=11 // pred_fallthru
          _
        // Predicated region
        $region17: #{tpu_custom_call.1} parent=11 // pred_check
          %p338 = pneg %p191
        $region18: #{tpu_custom_call.1} parent=11 // pred_check_branch
          %340 = sbr.rel (%p338) target = $region20
        $region19: #{tpu_custom_call.1} parent=11 // pred_region
          _
        $region20: #{tpu_custom_call.1} parent=11 // pred_fallthru
          _
        // Predicated region
        $region21: #{tpu_custom_call.1} parent=11 // pred_check
          %p341 = pneg %p212
        $region22: #{tpu_custom_call.1} parent=11 // pred_check_branch
          %343 = sbr.rel (%p341) target = $region24
        $region23: #{tpu_custom_call.1} parent=11 // pred_region
          %s345 = ssub.s32 256, 256
          %346 = vsyncadd [#allocation12], %s345
          %s347 = sshll.u32 [#allocation13], 4
          %s348 = int_to_ptr.vmem [resolvable:$true] %s347
          %353 = dma.hbm_to_vmem [thread:$0]  %s6, 256, %s348, [#allocation12], 64, 64, 4
        $region24: #{tpu_custom_call.1} parent=11 // pred_fallthru
          _
        // Predicated region
        $region25: #{tpu_custom_call.1} parent=11 // pred_check
          %p354 = pneg %p233
        $region26: #{tpu_custom_call.1} parent=11 // pred_check_branch
          %356 = sbr.rel (%p354) target = $region28
        $region27: #{tpu_custom_call.1} parent=11 // pred_region
          %s358 = ssub.s32 256, 256
          %359 = vsyncadd [#allocation15], %s358
          %s360 = sshll.u32 [#allocation14], 4
          %s361 = int_to_ptr.vmem [resolvable:$true] %s360
          %366 = dma.hbm_to_vmem [thread:$0]  %s7, 256, %s361, [#allocation15], 64, 64, 4
        $region28: #{tpu_custom_call.1} parent=11 // pred_fallthru
          _
        // Predicated region
        $region29: #{tpu_custom_call.1} parent=11 // pred_check
          %p367 = pneg %p254
        $region30: #{tpu_custom_call.1} parent=11 // pred_check_branch
          %369 = sbr.rel (%p367) target = $region32
        $region31: #{tpu_custom_call.1} parent=11 // pred_region
          _
        $region32: #{tpu_custom_call.1} parent=11 // pred_fallthru
          _
      $region12: #{tpu_custom_call.1} parent=5 // pred_fallthru
        _
      %p370 = scmp.lt.s32.totalorder %s31, 4
      // Predicated region
      $region33: #{tpu_custom_call.1} parent=5 // pred_check
        %p371 = pneg %p370
      $region34: #{tpu_custom_call.1} parent=5 // pred_check_branch
        %373 = sbr.rel (%p371) target = $region36
      $region35: #{tpu_custom_call.1} parent=5 // pred_region
        // Predicated region
        $region37: #{tpu_custom_call.1} parent=35 // pred_check
          %p374 = pneg %p65
        $region38: #{tpu_custom_call.1} parent=35 // pred_check_branch
          %376 = sbr.rel (%p374) target = $region40
        $region39: #{tpu_custom_call.1} parent=35 // pred_region
          %s377 = sand.u32 %s55, 1
          %s378 = scalar_lea.sflag [#allocation6], %s377
          %s379 = sand.u32 %s55, 1
          %s380 = smul.addr %s379, 4
          %s381 = scalar_lea.vmem [#allocation5], %s380
          %s383 = ssub.s32 64, 64
          %384 = vsyncadd %s378, %s383
          %s385 = smul.addr %s38, 2
          %s386 = sadd.s32 %s39, %s385
          %s387 = smul.addr %s386, 64
          %s388 = scalar_lea.hbm %s0, %s387
          %s390 = sshll.u32 %s381, 4
          %s391 = int_to_ptr.vmem [resolvable:$true] %s390
          %393 = dma.hbm_to_vmem [thread:$0]  %s388, 64, %s391, %s378
        $region40: #{tpu_custom_call.1} parent=35 // pred_fallthru
          _
        // Predicated region
        $region41: #{tpu_custom_call.1} parent=35 // pred_check
          %p394 = pneg %p91
        $region42: #{tpu_custom_call.1} parent=35 // pred_check_branch
          %396 = sbr.rel (%p394) target = $region44
        $region43: #{tpu_custom_call.1} parent=35 // pred_region
          %s397 = sand.u32 %s31, 1
          %s398 = scalar_lea.sflag [#allocation9], %s397
          %s399 = sand.u32 %s81, 1
          %s400 = smul.addr %s399, 8
          %s401 = scalar_lea.vmem [#allocation8], %s400
          %s403 = ssub.s32 128, 128
          %404 = vsyncadd %s398, %s403
          %s405 = smul.addr %s38, 2
          %s406 = smul.addr %s405, 64
          %s407 = scalar_lea.hbm %s1, %s406
          %s408 = sshll.u32 %s401, 4
          %s409 = int_to_ptr.vmem [resolvable:$true] %s408
          %414 = dma.hbm_to_vmem [thread:$0]  %s407, 128, %s409, %s398, 64, 64, 4
        $region44: #{tpu_custom_call.1} parent=35 // pred_fallthru
          _
        // Predicated region
        $region45: #{tpu_custom_call.1} parent=35 // pred_check
          %p415 = pneg %p117
        $region46: #{tpu_custom_call.1} parent=35 // pred_check_branch
          %417 = sbr.rel (%p415) target = $region48
        $region47: #{tpu_custom_call.1} parent=35 // pred_region
          %s418 = sand.u32 %s31, 1
          %s419 = scalar_lea.sflag [#allocation9], %s418
          %s420 = sand.u32 %s107, 1
          %s421 = smul.addr %s420, 8
          %s422 = scalar_lea.vmem [#allocation10], %s421
          %s424 = ssub.s32 128, 128
          %425 = vsyncadd %s419, %s424
          %s426 = smul.addr %s38, 2
          %s427 = smul.addr %s426, 64
          %s428 = scalar_lea.hbm %s2, %s427
          %s429 = sshll.u32 %s422, 4
          %s430 = int_to_ptr.vmem [resolvable:$true] %s429
          %435 = dma.hbm_to_vmem [thread:$0]  %s428, 128, %s430, %s419, 64, 64, 4
        $region48: #{tpu_custom_call.1} parent=35 // pred_fallthru
          _
        // Predicated region
        $region49: #{tpu_custom_call.1} parent=35 // pred_check
          %p436 = pneg %p143
        $region50: #{tpu_custom_call.1} parent=35 // pred_check_branch
          %438 = sbr.rel (%p436) target = $region52
        $region51: #{tpu_custom_call.1} parent=35 // pred_region
          %p439 = scmp.lt.s32.totalorder %s38, 1
          %s440 = scalar_select %p439, %s38, 1
          %s441 = scalar_lea.vmem %s3, %s440
        $region52: #{tpu_custom_call.1} parent=35 // pred_fallthru
          _
      $region36: #{tpu_custom_call.1} parent=5 // pred_fallthru
        _
      %p442 = scmp.le.s32.totalorder 1, %s31
      %p443 = scmp.lt.s32.totalorder %s31, 5
      %p444 = pnand %p442, %p443
      %p445 = pneg %p444
      // Predicated region
      $region53: #{tpu_custom_call.1} parent=5 // pred_check
        _
      $region54: #{tpu_custom_call.1} parent=5 // pred_check_branch
        %447 = sbr.rel (%p444) target = $region56
      $region55: #{tpu_custom_call.1} parent=5 // pred_region
        %s448 = ssub.s32 %s31, 1
        %s449 = sand.u32 %s58, 1
        %s450 = scalar_lea.sflag [#allocation6], %s449
        %s451 = sand.u32 %s58, 1
        %s452 = smul.addr %s451, 4
        %s453 = scalar_lea.vmem [#allocation5], %s452
        // Predicated region
        $region57: #{tpu_custom_call.1} parent=55 // pred_check
          %p454 = pneg %p71
        $region58: #{tpu_custom_call.1} parent=55 // pred_check_branch
          %456 = sbr.rel (%p454) target = $region60
        $region59: #{tpu_custom_call.1} parent=55 // pred_region
          %457 = dma.done %s450, 64
        $region60: #{tpu_custom_call.1} parent=55 // pred_fallthru
          _
        %s458 = sand.u32 %s36, 1
        %s459 = scalar_lea.sflag [#allocation9], %s458
        %s460 = sand.u32 %s84, 1
        %s461 = smul.addr %s460, 8
        %s462 = scalar_lea.vmem [#allocation8], %s461
        // Predicated region
        $region61: #{tpu_custom_call.1} parent=55 // pred_check
          %p463 = pneg %p97
        $region62: #{tpu_custom_call.1} parent=55 // pred_check_branch
          %465 = sbr.rel (%p463) target = $region64
        $region63: #{tpu_custom_call.1} parent=55 // pred_region
          %466 = dma.done %s459, 128
        $region64: #{tpu_custom_call.1} parent=55 // pred_fallthru
          _
        %s467 = sand.u32 %s36, 1
        %s468 = scalar_lea.sflag [#allocation9], %s467
        %s469 = sand.u32 %s110, 1
        %s470 = smul.addr %s469, 8
        %s471 = scalar_lea.vmem [#allocation10], %s470
        // Predicated region
        $region65: #{tpu_custom_call.1} parent=55 // pred_check
          %p472 = pneg %p123
        $region66: #{tpu_custom_call.1} parent=55 // pred_check_branch
          %474 = sbr.rel (%p472) target = $region68
        $region67: #{tpu_custom_call.1} parent=55 // pred_region
          %475 = dma.done %s468, 128
        $region68: #{tpu_custom_call.1} parent=55 // pred_fallthru
          _
        // Predicated region
        $region69: #{tpu_custom_call.1} parent=55 // pred_check
          %p476 = pneg %p170
        $region70: #{tpu_custom_call.1} parent=55 // pred_check_branch
          %478 = sbr.rel (%p476) target = $region72
        $region71: #{tpu_custom_call.1} parent=55 // pred_region
          %479 = dma.done [#allocation12], 256
        $region72: #{tpu_custom_call.1} parent=55 // pred_fallthru
          _
        // Predicated region
        $region73: #{tpu_custom_call.1} parent=55 // pred_check
          %p480 = pneg %p212
        $region74: #{tpu_custom_call.1} parent=55 // pred_check_branch
          %482 = sbr.rel (%p480) target = $region76
        $region75: #{tpu_custom_call.1} parent=55 // pred_region
          %483 = dma.done [#allocation12], 256
        $region76: #{tpu_custom_call.1} parent=55 // pred_fallthru
          _
        // Predicated region
        $region77: #{tpu_custom_call.1} parent=55 // pred_check
          %p484 = pneg %p233
        $region78: #{tpu_custom_call.1} parent=55 // pred_check_branch
          %486 = sbr.rel (%p484) target = $region80
        $region79: #{tpu_custom_call.1} parent=55 // pred_region
          %487 = dma.done [#allocation15], 256
        $region80: #{tpu_custom_call.1} parent=55 // pred_fallthru
          _
        %s488 = sand.u32 %s58, 1
        %s489 = scalar_lea.sflag [#allocation6], %s488
        %s490 = sand.u32 %s58, 1
        %s491 = smul.addr %s490, 4
        %s492 = scalar_lea.vmem [#allocation5], %s491
        %p493 = pneg %p71
        %p494 = pneg %p68
        %s495 = sand.u32 %s36, 1
        %s496 = scalar_lea.sflag [#allocation9], %s495
        %s497 = sand.u32 %s84, 1
        %s498 = smul.addr %s497, 8
        %s499 = scalar_lea.vmem [#allocation8], %s498
        %p500 = pneg %p97
        %p501 = pneg %p94
        %s502 = sand.u32 %s36, 1
        %s503 = scalar_lea.sflag [#allocation9], %s502
        %s504 = sand.u32 %s110, 1
        %s505 = smul.addr %s504, 8
        %s506 = scalar_lea.vmem [#allocation10], %s505
        %p507 = pneg %p123
        %p508 = pneg %p120
        %p509 = scmp.lt.s32.totalorder %s40, 1
        %s510 = scalar_select %p509, %s40, 1
        %s511 = scalar_lea.vmem %s3, %s510
        %p512 = pneg %p149
        %p513 = pneg %p146
        %p514 = pneg %p170
        %p515 = pneg %p167
        %p516 = pneg %p191
        %p517 = pneg %p188
        %p518 = pneg %p212
        %p519 = pneg %p209
        %p520 = pneg %p233
        %p521 = pneg %p230
        %p522 = pneg %p254
        %p523 = pneg %p251
        %p524 = pneg %p282
        %p525 = pneg %p279
        %s526 = sand.u32 %s269, 1
        %s527 = scalar_lea.sflag [#allocation7], %s526
        %s528 = sand.u32 %s269, 1
        %s529 = smul.addr %s528, 8
        %s530 = scalar_lea.vmem [#allocation16], %s529
        %p531 = pneg %p310
        %p532 = pneg %p307
        %s533 = sand.u32 %s297, 1
        %s534 = scalar_lea.sflag [#allocation18], %s533
        %s535 = sand.u32 %s297, 1
        %s536 = smul.addr %s535, 32
        %s537 = scalar_lea.vmem [#allocation17], %s536
        %p538 = scmp.lt.s32.totalorder %s40, 1
        %s539 = scalar_select %p538, %s40, 1
        %s540 = scalar_lea.vmem %s3, %s539
        %p542 = scmp.eq.s32.totalorder %s41, 0
        // Predicated region
        $region81: #{tpu_custom_call.1} parent=55 // pred_check
          %p543 = pneg %p542
        $region82: #{tpu_custom_call.1} parent=55 // pred_check_branch
          %545 = sbr.rel (%p543) target = $region84
        $region83: #{tpu_custom_call.1} parent=55 // pred_region
          %v546 = vld [vmem:[%s540] sm:$0x1]
          %vm547 = vcmp.eq.f32.partialorder %v546, 0.0
          %v548 = vsel %vm547, -1e+10, 0.0
          %vm549 = vcmask 122880
          %550 = vst.msk [vmem:[#allocation4] sm:$0x1] %vm549, %v548
          %v551 = vld [vmem:[%s462] sm:$0xf]
          %v552 = vld [vmem:[%s462 + $0x4] sm:$0xf]
          %v553 = vld [vmem:[%s5] sm:$0xf]
          %v554 = vld [vmem:[%s5 + $0x4] sm:$0xf]
          %v555 = vld [vmem:[%s5 + $0x8] sm:$0xf]
          %v556 = vld [vmem:[%s5 + $0xc] sm:$0xf]
          %v557 = vld [vmem:[%s8 + $0x1] sm:$0x1]
          %v558 = vlaneseq
          %v559 = vshrl.u32 %v558, 7
          %v560 = vsub.s32 0, %v559
          %v561 = vrot.slane %v557, %v560
          %v564 = vunpack.c.l.b16 %v551
          %v565 = vunpack.c.l.b16 %v552
          %v566 = vpack.c.b16 %v565, %v564
          %v571 = vunpack.c.l.b16 %v553
          %v572 = vunpack.c.l.b16 %v554
          %v573 = vunpack.c.l.b16 %v555
          %v574 = vunpack.c.l.b16 %v556
          %v575 = vpack.c.b16 %v572, %v571
          %v576 = vpack.c.b16 %v574, %v573
          %vm579 = vcmask 261120
          %v581 = vsel %vm579, %v566, 0
          %583 = vmatprep.subr.bf16.mxu0 0
          %584 = vmatpush1.bf16.msra.mxu0 %v575
          %585 = vmatprep.subr.bf16.mxu0 0
          %586 = vmatpush1.bf16.msra.mxu0 %v576
          %587 = vmatprep.subr.bf16.mxu0 0
          %588 = vmatpush1.bf16.msra.mxu0 0
          %589 = vmatprep.subr.bf16.mxu0 0
          %590 = vmatpush1.bf16.msra.mxu0 0
          %591 = vmatprep.subr.bf16.mxu0 0
          %592 = vmatpush1.bf16.msra.mxu0 0
          %593 = vmatprep.subr.bf16.mxu0 0
          %594 = vmatpush1.bf16.msra.mxu0 0
          %595 = vmatprep.subr.bf16.mxu0 0
          %596 = vmatpush1.bf16.msra.mxu0 0
          %597 = vmatprep.subr.bf16.mxu0 0
          %598 = vmatpush1.bf16.msra.mxu0 0
          %599 = vmatprep.subr.bf16.mxu0 0
          %600 = vmatpush1.bf16.msra.mxu0 0
          %601 = vmatprep.subr.bf16.mxu0 0
          %602 = vmatpush1.bf16.msra.mxu0 0
          %603 = vmatprep.subr.bf16.mxu0 0
          %604 = vmatpush1.bf16.msra.mxu0 0
          %605 = vmatprep.subr.bf16.mxu0 0
          %606 = vmatpush1.bf16.msra.mxu0 0
          %607 = vmatprep.subr.bf16.mxu0 0
          %608 = vmatpush1.bf16.msra.mxu0 0
          %609 = vmatprep.subr.bf16.mxu0 0
          %610 = vmatpush1.bf16.msra.mxu0 0
          %611 = vmatprep.subr.bf16.mxu0 0
          %612 = vmatpush1.bf16.msra.mxu0 0
          %613 = vmatprep.subr.bf16.mxu0 0
          %614 = vmatpush1.bf16.msra.mxu0 0
          %615 = vmatprep.mubr.bf16.mxu0 0
          %616 = vmatmul.mubr.bf16.gmra.mrb[0].mxu0 %v581
          %v617 = vpop.f32.mrb[0].mxu0
          %v618 = vadd.f32 %v561, %v617
          %v619 = vpop.f32.mrb[0].mxu0
          %v620 = vpop.f32.mrb[0].mxu0
          %v621 = vadd.f32 %v561, %v620
          %v622 = vpop.f32.mrb[0].mxu0
          %623 = vdwg.mxu0
          %v624 = vld [vmem:[%s471] sm:$0xf]
          %v625 = vld [vmem:[%s471 + $0x4] sm:$0xf]
          %v626 = vld [vmem:[#allocation13] sm:$0xf]
          %v627 = vld [vmem:[#allocation13 + $0x4] sm:$0xf]
          %v628 = vld [vmem:[#allocation13 + $0x8] sm:$0xf]
          %v629 = vld [vmem:[#allocation13 + $0xc] sm:$0xf]
          %v630 = vld [vmem:[%s8 + $0x2] sm:$0x1]
          %v631 = vlaneseq
          %v632 = vshrl.u32 %v631, 7
          %v633 = vsub.s32 0, %v632
          %v634 = vrot.slane %v630, %v633
          %v637 = vunpack.c.l.b16 %v624
          %v638 = vunpack.c.l.b16 %v625
          %v639 = vpack.c.b16 %v638, %v637
          %v644 = vunpack.c.l.b16 %v626
          %v645 = vunpack.c.l.b16 %v627
          %v646 = vunpack.c.l.b16 %v628
          %v647 = vunpack.c.l.b16 %v629
          %v648 = vpack.c.b16 %v645, %v644
          %v649 = vpack.c.b16 %v647, %v646
          %v653 = vsel %vm579, %v639, 0
          %655 = vmatprep.subr.bf16.mxu0 0
          %656 = vmatpush1.bf16.msra.mxu0 %v648
          %657 = vmatprep.subr.bf16.mxu0 0
          %658 = vmatpush1.bf16.msra.mxu0 %v649
          %659 = vmatprep.subr.bf16.mxu0 0
          %660 = vmatpush1.bf16.msra.mxu0 0
          %661 = vmatprep.subr.bf16.mxu0 0
          %662 = vmatpush1.bf16.msra.mxu0 0
          %663 = vmatprep.subr.bf16.mxu0 0
          %664 = vmatpush1.bf16.msra.mxu0 0
          %665 = vmatprep.subr.bf16.mxu0 0
          %666 = vmatpush1.bf16.msra.mxu0 0
          %667 = vmatprep.subr.bf16.mxu0 0
          %668 = vmatpush1.bf16.msra.mxu0 0
          %669 = vmatprep.subr.bf16.mxu0 0
          %670 = vmatpush1.bf16.msra.mxu0 0
          %671 = vmatprep.subr.bf16.mxu0 0
          %672 = vmatpush1.bf16.msra.mxu0 0
          %673 = vmatprep.subr.bf16.mxu0 0
          %674 = vmatpush1.bf16.msra.mxu0 0
          %675 = vmatprep.subr.bf16.mxu0 0
          %676 = vmatpush1.bf16.msra.mxu0 0
          %677 = vmatprep.subr.bf16.mxu0 0
          %678 = vmatpush1.bf16.msra.mxu0 0
          %679 = vmatprep.subr.bf16.mxu0 0
          %680 = vmatpush1.bf16.msra.mxu0 0
          %681 = vmatprep.subr.bf16.mxu0 0
          %682 = vmatpush1.bf16.msra.mxu0 0
          %683 = vmatprep.subr.bf16.mxu0 0
          %684 = vmatpush1.bf16.msra.mxu0 0
          %685 = vmatprep.subr.bf16.mxu0 0
          %686 = vmatpush1.bf16.msra.mxu0 0
          %687 = vmatprep.mubr.bf16.mxu0 0
          %688 = vmatmul.mubr.bf16.gmra.mrb[0].mxu0 %v653
          %v689 = vpop.f32.mrb[0].mxu0
          %v690 = vadd.f32 %v634, %v689
          %v691 = vpop.f32.mrb[0].mxu0
          %v692 = vpop.f32.mrb[0].mxu0
          %v693 = vadd.f32 %v634, %v692
          %v694 = vpop.f32.mrb[0].mxu0
          %695 = vdwg.mxu0
          %696 = vxpose.xlu0.b32.start [1/16] %v618, 128
          %697 = vxpose.xlu0.b32.cont [2/16] %v621, 128
          %698 = vxpose.xlu0.b32.cont [3/16] 0.0, 128
          %699 = vxpose.xlu0.b32.cont [4/16] 0.0, 128
          %700 = vxpose.xlu0.b32.cont [5/16] 0.0, 128
          %701 = vxpose.xlu0.b32.cont [6/16] 0.0, 128
          %702 = vxpose.xlu0.b32.cont [7/16] 0.0, 128
          %703 = vxpose.xlu0.b32.cont [8/16] 0.0, 128
          %704 = vxpose.xlu0.b32.cont [9/16] 0.0, 128
          %705 = vxpose.xlu0.b32.cont [10/16] 0.0, 128
          %706 = vxpose.xlu0.b32.cont [11/16] 0.0, 128
          %707 = vxpose.xlu0.b32.cont [12/16] 0.0, 128
          %708 = vxpose.xlu0.b32.cont [13/16] 0.0, 128
          %709 = vxpose.xlu0.b32.cont [14/16] 0.0, 128
          %710 = vxpose.xlu0.b32.cont [15/16] 0.0, 128
          %711 = vxpose.xlu0.b32.end [16/16] 0.0, 128
          %v712 = vpop.trf.xlu0
          %v713 = vpop.trf.xlu0
          %v714 = vpop.trf.xlu0
          %v715 = vpop.trf.xlu0
          %v716 = vpop.trf.xlu0
          %v717 = vpop.trf.xlu0
          %v718 = vpop.trf.xlu0
          %v719 = vpop.trf.xlu0
          %v720 = vpop.trf.xlu0
          %v721 = vpop.trf.xlu0
          %v722 = vpop.trf.xlu0
          %v723 = vpop.trf.xlu0
          %v724 = vpop.trf.xlu0
          %v725 = vpop.trf.xlu0
          %v726 = vpop.trf.xlu0
          %v727 = vpop.trf.xlu0
          %v728 = vpack.c.bf16 %v712, %v712
          %vm729 = vcmask 125952
          %730 = vst.msk [vmem:[#allocation2] sm:$0xf] %vm729, %v728
          %v731 = vpack.c.bf16 %v693, %v690
          %vm732 = vcmask 64512
          %733 = vst.msk [vmem:[#allocation3] sm:$0xff] %vm732, %v731
          %736 = vrot.lane.b32.xlu0 %v618, 120
          %v737 = vpop.permute.xlu0 %736
          %738 = vrot.lane.b32.xlu0 %v621, 120
          %v739 = vpop.permute.xlu0 %738
          %742 = vxpose.xlu0.b32.start [1/16] %v737, 128
          %743 = vxpose.xlu0.b32.cont [2/16] %v739, 128
          %744 = vxpose.xlu0.b32.cont [3/16] 0.0, 128
          %745 = vxpose.xlu0.b32.cont [4/16] 0.0, 128
          %746 = vxpose.xlu0.b32.cont [5/16] 0.0, 128
          %747 = vxpose.xlu0.b32.cont [6/16] 0.0, 128
          %748 = vxpose.xlu0.b32.cont [7/16] 0.0, 128
          %749 = vxpose.xlu0.b32.cont [8/16] 0.0, 128
          %750 = vxpose.xlu0.b32.cont [9/16] 0.0, 128
          %751 = vxpose.xlu0.b32.cont [10/16] 0.0, 128
          %752 = vxpose.xlu0.b32.cont [11/16] 0.0, 128
          %753 = vxpose.xlu0.b32.cont [12/16] 0.0, 128
          %754 = vxpose.xlu0.b32.cont [13/16] 0.0, 128
          %755 = vxpose.xlu0.b32.cont [14/16] 0.0, 128
          %756 = vxpose.xlu0.b32.cont [15/16] 0.0, 128
          %757 = vxpose.xlu0.b32.end [16/16] 0.0, 128
          %v758 = vpop.trf.xlu0
          %v759 = vpop.trf.xlu0
          %v760 = vpop.trf.xlu0
          %v761 = vpop.trf.xlu0
          %v762 = vpop.trf.xlu0
          %v763 = vpop.trf.xlu0
          %v764 = vpop.trf.xlu0
          %v765 = vpop.trf.xlu0
          %v766 = vpop.trf.xlu0
          %v767 = vpop.trf.xlu0
          %v768 = vpop.trf.xlu0
          %v769 = vpop.trf.xlu0
          %v770 = vpop.trf.xlu0
          %v771 = vpop.trf.xlu0
          %v772 = vpop.trf.xlu0
          %v773 = vpop.trf.xlu0
          %v774 = vpack.c.bf16 %v758, %v758
          %s775 = scalar_lea.vmem [#allocation2], 4
          %776 = vst.msk [vmem:[%s775] sm:$0xf] %vm729, %v774
          %778 = vrot.lane.b32.xlu0 %v731, 120
          %v779 = vpop.permute.xlu0 %778
          %s781 = scalar_lea.vmem [#allocation3], 8
          %782 = vst.msk [vmem:[%s781] sm:$0xff] %vm732, %v779
          %783 = vrot.lane.b32.xlu0 %v618, 112
          %v784 = vpop.permute.xlu0 %783
          %785 = vrot.lane.b32.xlu0 %v621, 112
          %v786 = vpop.permute.xlu0 %785
          %789 = vxpose.xlu0.b32.start [1/16] %v784, 128
          %790 = vxpose.xlu0.b32.cont [2/16] %v786, 128
          %791 = vxpose.xlu0.b32.cont [3/16] 0.0, 128
          %792 = vxpose.xlu0.b32.cont [4/16] 0.0, 128
          %793 = vxpose.xlu0.b32.cont [5/16] 0.0, 128
          %794 = vxpose.xlu0.b32.cont [6/16] 0.0, 128
          %795 = vxpose.xlu0.b32.cont [7/16] 0.0, 128
          %796 = vxpose.xlu0.b32.cont [8/16] 0.0, 128
          %797 = vxpose.xlu0.b32.cont [9/16] 0.0, 128
          %798 = vxpose.xlu0.b32.cont [10/16] 0.0, 128
          %799 = vxpose.xlu0.b32.cont [11/16] 0.0, 128
          %800 = vxpose.xlu0.b32.cont [12/16] 0.0, 128
          %801 = vxpose.xlu0.b32.cont [13/16] 0.0, 128
          %802 = vxpose.xlu0.b32.cont [14/16] 0.0, 128
          %803 = vxpose.xlu0.b32.cont [15/16] 0.0, 128
          %804 = vxpose.xlu0.b32.end [16/16] 0.0, 128
          %v805 = vpop.trf.xlu0
          %v806 = vpop.trf.xlu0
          %v807 = vpop.trf.xlu0
          %v808 = vpop.trf.xlu0
          %v809 = vpop.trf.xlu0
          %v810 = vpop.trf.xlu0
          %v811 = vpop.trf.xlu0
          %v812 = vpop.trf.xlu0
          %v813 = vpop.trf.xlu0
          %v814 = vpop.trf.xlu0
          %v815 = vpop.trf.xlu0
          %v816 = vpop.trf.xlu0
          %v817 = vpop.trf.xlu0
          %v818 = vpop.trf.xlu0
          %v819 = vpop.trf.xlu0
          %v820 = vpop.trf.xlu0
          %v821 = vpack.c.bf16 %v805, %v805
          %s822 = scalar_lea.vmem [#allocation2], 8
          %823 = vst.msk [vmem:[%s822] sm:$0xf] %vm729, %v821
          %824 = vrot.lane.b32.xlu0 %v731, 112
          %v825 = vpop.permute.xlu0 %824
          %s827 = scalar_lea.vmem [#allocation3], 16
          %828 = vst.msk [vmem:[%s827] sm:$0xff] %vm732, %v825
          %829 = vrot.lane.b32.xlu0 %v618, 104
          %v830 = vpop.permute.xlu0 %829
          %831 = vrot.lane.b32.xlu0 %v621, 104
          %v832 = vpop.permute.xlu0 %831
          %835 = vxpose.xlu0.b32.start [1/16] %v830, 128
          %836 = vxpose.xlu0.b32.cont [2/16] %v832, 128
          %837 = vxpose.xlu0.b32.cont [3/16] 0.0, 128
          %838 = vxpose.xlu0.b32.cont [4/16] 0.0, 128
          %839 = vxpose.xlu0.b32.cont [5/16] 0.0, 128
          %840 = vxpose.xlu0.b32.cont [6/16] 0.0, 128
          %841 = vxpose.xlu0.b32.cont [7/16] 0.0, 128
          %842 = vxpose.xlu0.b32.cont [8/16] 0.0, 128
          %843 = vxpose.xlu0.b32.cont [9/16] 0.0, 128
          %844 = vxpose.xlu0.b32.cont [10/16] 0.0, 128
          %845 = vxpose.xlu0.b32.cont [11/16] 0.0, 128
          %846 = vxpose.xlu0.b32.cont [12/16] 0.0, 128
          %847 = vxpose.xlu0.b32.cont [13/16] 0.0, 128
          %848 = vxpose.xlu0.b32.cont [14/16] 0.0, 128
          %849 = vxpose.xlu0.b32.cont [15/16] 0.0, 128
          %850 = vxpose.xlu0.b32.end [16/16] 0.0, 128
          %v851 = vpop.trf.xlu0
          %v852 = vpop.trf.xlu0
          %v853 = vpop.trf.xlu0
          %v854 = vpop.trf.xlu0
          %v855 = vpop.trf.xlu0
          %v856 = vpop.trf.xlu0
          %v857 = vpop.trf.xlu0
          %v858 = vpop.trf.xlu0
          %v859 = vpop.trf.xlu0
          %v860 = vpop.trf.xlu0
          %v861 = vpop.trf.xlu0
          %v862 = vpop.trf.xlu0
          %v863 = vpop.trf.xlu0
          %v864 = vpop.trf.xlu0
          %v865 = vpop.trf.xlu0
          %v866 = vpop.trf.xlu0
          %v867 = vpack.c.bf16 %v851, %v851
          %s868 = scalar_lea.vmem [#allocation2], 12
          %869 = vst.msk [vmem:[%s868] sm:$0xf] %vm729, %v867
          %870 = vrot.lane.b32.xlu0 %v731, 104
          %v871 = vpop.permute.xlu0 %870
          %s873 = scalar_lea.vmem [#allocation3], 24
          %874 = vst.msk [vmem:[%s873] sm:$0xff] %vm732, %v871
        $region84: #{tpu_custom_call.1} parent=55 // pred_fallthru
          _
        %v875 = vld [vmem:[%s453] sm:$0xf]
        %v876 = vld [vmem:[#allocation11] sm:$0xf]
        %v877 = vld [vmem:[#allocation11 + $0x4] sm:$0xf]
        %v878 = vld [vmem:[#allocation11 + $0x8] sm:$0xf]
        %v879 = vld [vmem:[#allocation11 + $0xc] sm:$0xf]
        %v880 = vld [vmem:[%s8] sm:$0x1]
        %v881 = vlaneseq
        %v882 = vshrl.u32 %v881, 7
        %v883 = vsub.s32 0, %v882
        %v884 = vrot.slane %v880, %v883
        %v889 = vunpack.c.l.b16 %v876
        %v890 = vunpack.c.l.b16 %v877
        %v891 = vunpack.c.l.b16 %v878
        %v892 = vunpack.c.l.b16 %v879
        %v893 = vpack.c.b16 %v890, %v889
        %v894 = vpack.c.b16 %v892, %v891
        %vm897 = vcmask 261120
        %v899 = vsel %vm897, %v875, 0
        %901 = vmatprep.subr.bf16.mxu0 0
        %902 = vmatpush1.bf16.msra.mxu0 %v893
        %903 = vmatprep.subr.bf16.mxu0 0
        %904 = vmatpush1.bf16.msra.mxu0 %v894
        %905 = vmatprep.subr.bf16.mxu0 0
        %906 = vmatpush1.bf16.msra.mxu0 0
        %907 = vmatprep.subr.bf16.mxu0 0
        %908 = vmatpush1.bf16.msra.mxu0 0
        %909 = vmatprep.subr.bf16.mxu0 0
        %910 = vmatpush1.bf16.msra.mxu0 0
        %911 = vmatprep.subr.bf16.mxu0 0
        %912 = vmatpush1.bf16.msra.mxu0 0
        %913 = vmatprep.subr.bf16.mxu0 0
        %914 = vmatpush1.bf16.msra.mxu0 0
        %915 = vmatprep.subr.bf16.mxu0 0
        %916 = vmatpush1.bf16.msra.mxu0 0
        %917 = vmatprep.subr.bf16.mxu0 0
        %918 = vmatpush1.bf16.msra.mxu0 0
        %919 = vmatprep.subr.bf16.mxu0 0
        %920 = vmatpush1.bf16.msra.mxu0 0
        %921 = vmatprep.subr.bf16.mxu0 0
        %922 = vmatpush1.bf16.msra.mxu0 0
        %923 = vmatprep.subr.bf16.mxu0 0
        %924 = vmatpush1.bf16.msra.mxu0 0
        %925 = vmatprep.subr.bf16.mxu0 0
        %926 = vmatpush1.bf16.msra.mxu0 0
        %927 = vmatprep.subr.bf16.mxu0 0
        %928 = vmatpush1.bf16.msra.mxu0 0
        %929 = vmatprep.subr.bf16.mxu0 0
        %930 = vmatpush1.bf16.msra.mxu0 0
        %931 = vmatprep.subr.bf16.mxu0 0
        %932 = vmatpush1.bf16.msra.mxu0 0
        %933 = vmatprep.mubr.bf16.mxu0 0
        %934 = vmatmul.mubr.bf16.gmra.mrb[0].mxu0 %v899
        %v935 = vpop.f32.mrb[0].mxu0
        %v936 = vadd.f32 %v884, %v935
        %v937 = vpop.f32.mrb[0].mxu0
        %v938 = vpop.f32.mrb[0].mxu0
        %v939 = vpop.f32.mrb[0].mxu0
        %940 = vdwg.mxu0
        %v941 = vmul.f32 %v936, 0.35355338
        %v942 = vld [vmem:[#allocation4] sm:$0x1]
        %v943 = vpack.c.bf16 %v941, %v941
        %v944 = vld [vmem:[#allocation2] sm:$0xf]
        %v946 = vlaneseq
        %v947 = vshrl.u32 %v946, 7
        %v948 = vsub.s32 0, %v947
        %v949 = vrot.slane %v942, %v948
        %vm951 = vcmask 64512
        %v953 = vsel %vm951, %v943, 0
        %vm955 = vcmask 1043456
        %v957 = vsel %vm955, %v944, 0
        %959 = vmatprep.subr.bf16.mxu0 0
        %960 = vmatpush1.bf16.msra.mxu0 %v957
        %961 = vmatprep.subr.bf16.mxu0 0
        %962 = vmatpush1.bf16.msra.mxu0 0
        %963 = vmatprep.subr.bf16.mxu0 0
        %964 = vmatpush1.bf16.msra.mxu0 0
        %965 = vmatprep.subr.bf16.mxu0 0
        %966 = vmatpush1.bf16.msra.mxu0 0
        %967 = vmatprep.subr.bf16.mxu0 0
        %968 = vmatpush1.bf16.msra.mxu0 0
        %969 = vmatprep.subr.bf16.mxu0 0
        %970 = vmatpush1.bf16.msra.mxu0 0
        %971 = vmatprep.subr.bf16.mxu0 0
        %972 = vmatpush1.bf16.msra.mxu0 0
        %973 = vmatprep.subr.bf16.mxu0 0
        %974 = vmatpush1.bf16.msra.mxu0 0
        %975 = vmatprep.subr.bf16.mxu0 0
        %976 = vmatpush1.bf16.msra.mxu0 0
        %977 = vmatprep.subr.bf16.mxu0 0
        %978 = vmatpush1.bf16.msra.mxu0 0
        %979 = vmatprep.subr.bf16.mxu0 0
        %980 = vmatpush1.bf16.msra.mxu0 0
        %981 = vmatprep.subr.bf16.mxu0 0
        %982 = vmatpush1.bf16.msra.mxu0 0
        %983 = vmatprep.subr.bf16.mxu0 0
        %984 = vmatpush1.bf16.msra.mxu0 0
        %985 = vmatprep.subr.bf16.mxu0 0
        %986 = vmatpush1.bf16.msra.mxu0 0
        %987 = vmatprep.subr.bf16.mxu0 0
        %988 = vmatpush1.bf16.msra.mxu0 0
        %989 = vmatprep.subr.bf16.mxu0 0
        %990 = vmatpush1.bf16.msra.mxu0 0
        %991 = vmatprep.mubr.bf16.mxu0 0
        %992 = vmatmul.mubr.bf16.gmra.mrb[0].mxu0 %v953
        %v993 = vpop.f32.mrb[0].mxu0
        %v994 = vadd.f32 %v949, %v993
        %v995 = vpop.f32.mrb[0].mxu0
        %v996 = vpop.f32.mrb[0].mxu0
        %v997 = vpop.f32.mrb[0].mxu0
        %998 = vdwg.mxu0
        %vm999 = vcmask 130048
        %v1000 = vsel %vm999, %v994, -inf
        %1001 = vmax.xlane.f32.xlu0 %v1000
        %v1002 = vpop.xlane.xlu0 %1001
        %v1003 = vsub.f32 %v994, %v1002
        %v1004 = vmul.f32 %v1003, 1.442695
        %v1005 = vpow.pop %v1004
        %v1006 = vsel %vm999, %v1005, 0.0
        %1007 = vadd.xlane.f32.xlu0 %v1006
        %v1008 = vpop.xlane.xlu0 %1007
        %v1009 = vrcp.pop %v1008
        %v1010 = vmul.f32 %v1005, %v1009
        %1011 = vst.msk [vmem:[%s537] sm:$0xff] %vm999, %v1010
        %v1012 = vpack.c.bf16 %v1010, %v1010
        %v1013 = vld [vmem:[#allocation3] sm:$0xff]
        %v1015 = vsel %vm999, %v1012, 0
        %1017 = vmatprep.subr.bf16.mxu0 0
        %1018 = vmatpush1.bf16.msra.mxu0 %v1013
        %1019 = vmatprep.subr.bf16.mxu0 0
        %1020 = vmatpush1.bf16.msra.mxu0 0
        %1021 = vmatprep.subr.bf16.mxu0 0
        %1022 = vmatpush1.bf16.msra.mxu0 0
        %1023 = vmatprep.subr.bf16.mxu0 0
        %1024 = vmatpush1.bf16.msra.mxu0 0
        %1025 = vmatprep.subr.bf16.mxu0 0
        %1026 = vmatpush1.bf16.msra.mxu0 0
        %1027 = vmatprep.subr.bf16.mxu0 0
        %1028 = vmatpush1.bf16.msra.mxu0 0
        %1029 = vmatprep.subr.bf16.mxu0 0
        %1030 = vmatpush1.bf16.msra.mxu0 0
        %1031 = vmatprep.subr.bf16.mxu0 0
        %1032 = vmatpush1.bf16.msra.mxu0 0
        %1033 = vmatprep.subr.bf16.mxu0 0
        %1034 = vmatpush1.bf16.msra.mxu0 0
        %1035 = vmatprep.subr.bf16.mxu0 0
        %1036 = vmatpush1.bf16.msra.mxu0 0
        %1037 = vmatprep.subr.bf16.mxu0 0
        %1038 = vmatpush1.bf16.msra.mxu0 0
        %1039 = vmatprep.subr.bf16.mxu0 0
        %1040 = vmatpush1.bf16.msra.mxu0 0
        %1041 = vmatprep.subr.bf16.mxu0 0
        %1042 = vmatpush1.bf16.msra.mxu0 0
        %1043 = vmatprep.subr.bf16.mxu0 0
        %1044 = vmatpush1.bf16.msra.mxu0 0
        %1045 = vmatprep.subr.bf16.mxu0 0
        %1046 = vmatpush1.bf16.msra.mxu0 0
        %1047 = vmatprep.subr.bf16.mxu0 0
        %1048 = vmatpush1.bf16.msra.mxu0 0
        %1049 = vmatprep.mubr.bf16.mxu0 0
        %1050 = vmatmul.mubr.bf16.gmra.mrb[0].mxu0 %v1015
        %v1051 = vpop.f32.mrb[0].mxu0
        %v1052 = vadd.f32 0.0, %v1051
        %v1053 = vpop.f32.mrb[0].mxu0
        %v1054 = vpop.f32.mrb[0].mxu0
        %v1055 = vpop.f32.mrb[0].mxu0
        %1056 = vdwg.mxu0
        %v1057 = vpack.c.bf16 %v1052, %v1052
        %v1058 = vld [vmem:[#allocation14] sm:$0xf]
        %s1059 = scalar_lea.vmem [#allocation2], 4
        %v1060 = vld [vmem:[%s1059] sm:$0xf]
        %1062 = vrot.lane.b32.xlu0 %v943, 120
        %v1063 = vpop.permute.xlu0 %1062
        %v1065 = vsel %vm951, %v1063, 0
        %v1068 = vsel %vm955, %v1060, 0
        %1070 = vmatprep.subr.bf16.mxu0 0
        %1071 = vmatpush1.bf16.msra.mxu0 %v1068
        %1072 = vmatprep.subr.bf16.mxu0 0
        %1073 = vmatpush1.bf16.msra.mxu0 0
        %1074 = vmatprep.subr.bf16.mxu0 0
        %1075 = vmatpush1.bf16.msra.mxu0 0
        %1076 = vmatprep.subr.bf16.mxu0 0
        %1077 = vmatpush1.bf16.msra.mxu0 0
        %1078 = vmatprep.subr.bf16.mxu0 0
        %1079 = vmatpush1.bf16.msra.mxu0 0
        %1080 = vmatprep.subr.bf16.mxu0 0
        %1081 = vmatpush1.bf16.msra.mxu0 0
        %1082 = vmatprep.subr.bf16.mxu0 0
        %1083 = vmatpush1.bf16.msra.mxu0 0
        %1084 = vmatprep.subr.bf16.mxu0 0
        %1085 = vmatpush1.bf16.msra.mxu0 0
        %1086 = vmatprep.subr.bf16.mxu0 0
        %1087 = vmatpush1.bf16.msra.mxu0 0
        %1088 = vmatprep.subr.bf16.mxu0 0
        %1089 = vmatpush1.bf16.msra.mxu0 0
        %1090 = vmatprep.subr.bf16.mxu0 0
        %1091 = vmatpush1.bf16.msra.mxu0 0
        %1092 = vmatprep.subr.bf16.mxu0 0
        %1093 = vmatpush1.bf16.msra.mxu0 0
        %1094 = vmatprep.subr.bf16.mxu0 0
        %1095 = vmatpush1.bf16.msra.mxu0 0
        %1096 = vmatprep.subr.bf16.mxu0 0
        %1097 = vmatpush1.bf16.msra.mxu0 0
        %1098 = vmatprep.subr.bf16.mxu0 0
        %1099 = vmatpush1.bf16.msra.mxu0 0
        %1100 = vmatprep.subr.bf16.mxu0 0
        %1101 = vmatpush1.bf16.msra.mxu0 0
        %1102 = vmatprep.mubr.bf16.mxu0 0
        %1103 = vmatmul.mubr.bf16.gmra.mrb[0].mxu0 %v1065
        %v1104 = vpop.f32.mrb[0].mxu0
        %v1105 = vadd.f32 %v949, %v1104
        %v1106 = vpop.f32.mrb[0].mxu0
        %v1107 = vpop.f32.mrb[0].mxu0
        %v1108 = vpop.f32.mrb[0].mxu0
        %1109 = vdwg.mxu0
        %v1110 = vsel %vm999, %v1105, -inf
        %1111 = vmax.xlane.f32.xlu0 %v1110
        %v1112 = vpop.xlane.xlu0 %1111
        %v1113 = vsub.f32 %v1105, %v1112
        %v1114 = vmul.f32 %v1113, 1.442695
        %v1115 = vpow.pop %v1114
        %v1116 = vsel %vm999, %v1115, 0.0
        %1117 = vadd.xlane.f32.xlu0 %v1116
        %v1118 = vpop.xlane.xlu0 %1117
        %v1119 = vrcp.pop %v1118
        %v1120 = vmul.f32 %v1115, %v1119
        %s1121 = scalar_lea.vmem %s537, 8 [#allocation17]
        %1122 = vst.msk [vmem:[%s1121] sm:$0xff] %vm999, %v1120
        %v1123 = vpack.c.bf16 %v1120, %v1120
        %s1124 = scalar_lea.vmem [#allocation3], 8
        %v1125 = vld [vmem:[%s1124] sm:$0xff]
        %v1127 = vsel %vm999, %v1123, 0
        %1129 = vmatprep.subr.bf16.mxu0 0
        %1130 = vmatpush1.bf16.msra.mxu0 %v1125
        %1131 = vmatprep.subr.bf16.mxu0 0
        %1132 = vmatpush1.bf16.msra.mxu0 0
        %1133 = vmatprep.subr.bf16.mxu0 0
        %1134 = vmatpush1.bf16.msra.mxu0 0
        %1135 = vmatprep.subr.bf16.mxu0 0
        %1136 = vmatpush1.bf16.msra.mxu0 0
        %1137 = vmatprep.subr.bf16.mxu0 0
        %1138 = vmatpush1.bf16.msra.mxu0 0
        %1139 = vmatprep.subr.bf16.mxu0 0
        %1140 = vmatpush1.bf16.msra.mxu0 0
        %1141 = vmatprep.subr.bf16.mxu0 0
        %1142 = vmatpush1.bf16.msra.mxu0 0
        %1143 = vmatprep.subr.bf16.mxu0 0
        %1144 = vmatpush1.bf16.msra.mxu0 0
        %1145 = vmatprep.subr.bf16.mxu0 0
        %1146 = vmatpush1.bf16.msra.mxu0 0
        %1147 = vmatprep.subr.bf16.mxu0 0
        %1148 = vmatpush1.bf16.msra.mxu0 0
        %1149 = vmatprep.subr.bf16.mxu0 0
        %1150 = vmatpush1.bf16.msra.mxu0 0
        %1151 = vmatprep.subr.bf16.mxu0 0
        %1152 = vmatpush1.bf16.msra.mxu0 0
        %1153 = vmatprep.subr.bf16.mxu0 0
        %1154 = vmatpush1.bf16.msra.mxu0 0
        %1155 = vmatprep.subr.bf16.mxu0 0
        %1156 = vmatpush1.bf16.msra.mxu0 0
        %1157 = vmatprep.subr.bf16.mxu0 0
        %1158 = vmatpush1.bf16.msra.mxu0 0
        %1159 = vmatprep.subr.bf16.mxu0 0
        %1160 = vmatpush1.bf16.msra.mxu0 0
        %1161 = vmatprep.mubr.bf16.mxu0 0
        %1162 = vmatmul.mubr.bf16.gmra.mrb[0].mxu0 %v1127
        %v1163 = vpop.f32.mrb[0].mxu0
        %v1164 = vadd.f32 0.0, %v1163
        %v1165 = vpop.f32.mrb[0].mxu0
        %v1166 = vpop.f32.mrb[0].mxu0
        %v1167 = vpop.f32.mrb[0].mxu0
        %1168 = vdwg.mxu0
        %v1169 = vpack.c.bf16 %v1164, %v1164
        %v1170 = vld [vmem:[#allocation14 + $0x4] sm:$0xf]
        %v1172 = vsel %vm951, %v1169, 0
        %v1175 = vsel %vm955, %v1170, 0
        %1177 = vmatprep.subr.bf16.mxu0 0
        %1178 = vmatpush1.bf16.msra.mxu0 %v1175
        %1179 = vmatprep.subr.bf16.mxu0 0
        %1180 = vmatpush1.bf16.msra.mxu0 0
        %1181 = vmatprep.subr.bf16.mxu0 0
        %1182 = vmatpush1.bf16.msra.mxu0 0
        %1183 = vmatprep.subr.bf16.mxu0 0
        %1184 = vmatpush1.bf16.msra.mxu0 0
        %1185 = vmatprep.subr.bf16.mxu0 0
        %1186 = vmatpush1.bf16.msra.mxu0 0
        %1187 = vmatprep.subr.bf16.mxu0 0
        %1188 = vmatpush1.bf16.msra.mxu0 0
        %1189 = vmatprep.subr.bf16.mxu0 0
        %1190 = vmatpush1.bf16.msra.mxu0 0
        %1191 = vmatprep.subr.bf16.mxu0 0
        %1192 = vmatpush1.bf16.msra.mxu0 0
        %1193 = vmatprep.subr.bf16.mxu0 0
        %1194 = vmatpush1.bf16.msra.mxu0 0
        %1195 = vmatprep.subr.bf16.mxu0 0
        %1196 = vmatpush1.bf16.msra.mxu0 0
        %1197 = vmatprep.subr.bf16.mxu0 0
        %1198 = vmatpush1.bf16.msra.mxu0 0
        %1199 = vmatprep.subr.bf16.mxu0 0
        %1200 = vmatpush1.bf16.msra.mxu0 0
        %1201 = vmatprep.subr.bf16.mxu0 0
        %1202 = vmatpush1.bf16.msra.mxu0 0
        %1203 = vmatprep.subr.bf16.mxu0 0
        %1204 = vmatpush1.bf16.msra.mxu0 0
        %1205 = vmatprep.subr.bf16.mxu0 0
        %1206 = vmatpush1.bf16.msra.mxu0 0
        %1207 = vmatprep.subr.bf16.mxu0 0
        %1208 = vmatpush1.bf16.msra.mxu0 0
        %1209 = vmatprep.mubr.bf16.mxu0 0
        %1210 = vmatmul.mubr.bf16.gmra.mrb[0].mxu0 %v1172
        %v1211 = vpop.f32.mrb[0].mxu0
        %v1212 = vadd.f32 0.0, %v1211
        %v1213 = vpop.f32.mrb[0].mxu0
        %v1214 = vpop.f32.mrb[0].mxu0
        %v1215 = vpop.f32.mrb[0].mxu0
        %1216 = vdwg.mxu0
        %v1218 = vsel %vm951, %v1057, 0
        %v1221 = vsel %vm955, %v1058, 0
        %1223 = vmatprep.subr.bf16.mxu0 0
        %1224 = vmatpush1.bf16.msra.mxu0 %v1221
        %1225 = vmatprep.subr.bf16.mxu0 0
        %1226 = vmatpush1.bf16.msra.mxu0 0
        %1227 = vmatprep.subr.bf16.mxu0 0
        %1228 = vmatpush1.bf16.msra.mxu0 0
        %1229 = vmatprep.subr.bf16.mxu0 0
        %1230 = vmatpush1.bf16.msra.mxu0 0
        %1231 = vmatprep.subr.bf16.mxu0 0
        %1232 = vmatpush1.bf16.msra.mxu0 0
        %1233 = vmatprep.subr.bf16.mxu0 0
        %1234 = vmatpush1.bf16.msra.mxu0 0
        %1235 = vmatprep.subr.bf16.mxu0 0
        %1236 = vmatpush1.bf16.msra.mxu0 0
        %1237 = vmatprep.subr.bf16.mxu0 0
        %1238 = vmatpush1.bf16.msra.mxu0 0
        %1239 = vmatprep.subr.bf16.mxu0 0
        %1240 = vmatpush1.bf16.msra.mxu0 0
        %1241 = vmatprep.subr.bf16.mxu0 0
        %1242 = vmatpush1.bf16.msra.mxu0 0
        %1243 = vmatprep.subr.bf16.mxu0 0
        %1244 = vmatpush1.bf16.msra.mxu0 0
        %1245 = vmatprep.subr.bf16.mxu0 0
        %1246 = vmatpush1.bf16.msra.mxu0 0
        %1247 = vmatprep.subr.bf16.mxu0 0
        %1248 = vmatpush1.bf16.msra.mxu0 0
        %1249 = vmatprep.subr.bf16.mxu0 0
        %1250 = vmatpush1.bf16.msra.mxu0 0
        %1251 = vmatprep.subr.bf16.mxu0 0
        %1252 = vmatpush1.bf16.msra.mxu0 0
        %1253 = vmatprep.subr.bf16.mxu0 0
        %1254 = vmatpush1.bf16.msra.mxu0 0
        %1255 = vmatprep.mubr.bf16.mxu0 0
        %1256 = vmatmul.mubr.bf16.gmra.mrb[0].mxu0 %v1218
        %v1257 = vpop.f32.mrb[0].mxu0
        %v1258 = vadd.f32 %v1212, %v1257
        %v1259 = vpop.f32.mrb[0].mxu0
        %v1260 = vpop.f32.mrb[0].mxu0
        %v1261 = vpop.f32.mrb[0].mxu0
        %1262 = vdwg.mxu0
        %s1263 = scalar_lea.vmem [#allocation2], 8
        %v1264 = vld [vmem:[%s1263] sm:$0xf]
        %1265 = vrot.lane.b32.xlu0 %v943, 112
        %v1266 = vpop.permute.xlu0 %1265
        %v1268 = vsel %vm951, %v1266, 0
        %v1271 = vsel %vm955, %v1264, 0
        %1273 = vmatprep.subr.bf16.mxu0 0
        %1274 = vmatpush1.bf16.msra.mxu0 %v1271
        %1275 = vmatprep.subr.bf16.mxu0 0
        %1276 = vmatpush1.bf16.msra.mxu0 0
        %1277 = vmatprep.subr.bf16.mxu0 0
        %1278 = vmatpush1.bf16.msra.mxu0 0
        %1279 = vmatprep.subr.bf16.mxu0 0
        %1280 = vmatpush1.bf16.msra.mxu0 0
        %1281 = vmatprep.subr.bf16.mxu0 0
        %1282 = vmatpush1.bf16.msra.mxu0 0
        %1283 = vmatprep.subr.bf16.mxu0 0
        %1284 = vmatpush1.bf16.msra.mxu0 0
        %1285 = vmatprep.subr.bf16.mxu0 0
        %1286 = vmatpush1.bf16.msra.mxu0 0
        %1287 = vmatprep.subr.bf16.mxu0 0
        %1288 = vmatpush1.bf16.msra.mxu0 0
        %1289 = vmatprep.subr.bf16.mxu0 0
        %1290 = vmatpush1.bf16.msra.mxu0 0
        %1291 = vmatprep.subr.bf16.mxu0 0
        %1292 = vmatpush1.bf16.msra.mxu0 0
        %1293 = vmatprep.subr.bf16.mxu0 0
        %1294 = vmatpush1.bf16.msra.mxu0 0
        %1295 = vmatprep.subr.bf16.mxu0 0
        %1296 = vmatpush1.bf16.msra.mxu0 0
        %1297 = vmatprep.subr.bf16.mxu0 0
        %1298 = vmatpush1.bf16.msra.mxu0 0
        %1299 = vmatprep.subr.bf16.mxu0 0
        %1300 = vmatpush1.bf16.msra.mxu0 0
        %1301 = vmatprep.subr.bf16.mxu0 0
        %1302 = vmatpush1.bf16.msra.mxu0 0
        %1303 = vmatprep.subr.bf16.mxu0 0
        %1304 = vmatpush1.bf16.msra.mxu0 0
        %1305 = vmatprep.mubr.bf16.mxu0 0
        %1306 = vmatmul.mubr.bf16.gmra.mrb[0].mxu0 %v1268
        %v1307 = vpop.f32.mrb[0].mxu0
        %v1308 = vadd.f32 %v949, %v1307
        %v1309 = vpop.f32.mrb[0].mxu0
        %v1310 = vpop.f32.mrb[0].mxu0
        %v1311 = vpop.f32.mrb[0].mxu0
        %1312 = vdwg.mxu0
        %v1313 = vsel %vm999, %v1308, -inf
        %1314 = vmax.xlane.f32.xlu0 %v1313
        %v1315 = vpop.xlane.xlu0 %1314
        %v1316 = vsub.f32 %v1308, %v1315
        %v1317 = vmul.f32 %v1316, 1.442695
        %v1318 = vpow.pop %v1317
        %v1319 = vsel %vm999, %v1318, 0.0
        %1320 = vadd.xlane.f32.xlu0 %v1319
        %v1321 = vpop.xlane.xlu0 %1320
        %v1322 = vrcp.pop %v1321
        %v1323 = vmul.f32 %v1318, %v1322
        %s1324 = scalar_lea.vmem %s537, 16 [#allocation17]
        %1325 = vst.msk [vmem:[%s1324] sm:$0xff] %vm999, %v1323
        %v1326 = vpack.c.bf16 %v1323, %v1323
        %s1327 = scalar_lea.vmem [#allocation3], 16
        %v1328 = vld [vmem:[%s1327] sm:$0xff]
        %v1330 = vsel %vm999, %v1326, 0
        %1332 = vmatprep.subr.bf16.mxu0 0
        %1333 = vmatpush1.bf16.msra.mxu0 %v1328
        %1334 = vmatprep.subr.bf16.mxu0 0
        %1335 = vmatpush1.bf16.msra.mxu0 0
        %1336 = vmatprep.subr.bf16.mxu0 0
        %1337 = vmatpush1.bf16.msra.mxu0 0
        %1338 = vmatprep.subr.bf16.mxu0 0
        %1339 = vmatpush1.bf16.msra.mxu0 0
        %1340 = vmatprep.subr.bf16.mxu0 0
        %1341 = vmatpush1.bf16.msra.mxu0 0
        %1342 = vmatprep.subr.bf16.mxu0 0
        %1343 = vmatpush1.bf16.msra.mxu0 0
        %1344 = vmatprep.subr.bf16.mxu0 0
        %1345 = vmatpush1.bf16.msra.mxu0 0
        %1346 = vmatprep.subr.bf16.mxu0 0
        %1347 = vmatpush1.bf16.msra.mxu0 0
        %1348 = vmatprep.subr.bf16.mxu0 0
        %1349 = vmatpush1.bf16.msra.mxu0 0
        %1350 = vmatprep.subr.bf16.mxu0 0
        %1351 = vmatpush1.bf16.msra.mxu0 0
        %1352 = vmatprep.subr.bf16.mxu0 0
        %1353 = vmatpush1.bf16.msra.mxu0 0
        %1354 = vmatprep.subr.bf16.mxu0 0
        %1355 = vmatpush1.bf16.msra.mxu0 0
        %1356 = vmatprep.subr.bf16.mxu0 0
        %1357 = vmatpush1.bf16.msra.mxu0 0
        %1358 = vmatprep.subr.bf16.mxu0 0
        %1359 = vmatpush1.bf16.msra.mxu0 0
        %1360 = vmatprep.subr.bf16.mxu0 0
        %1361 = vmatpush1.bf16.msra.mxu0 0
        %1362 = vmatprep.subr.bf16.mxu0 0
        %1363 = vmatpush1.bf16.msra.mxu0 0
        %1364 = vmatprep.mubr.bf16.mxu0 0
        %1365 = vmatmul.mubr.bf16.gmra.mrb[0].mxu0 %v1330
        %v1366 = vpop.f32.mrb[0].mxu0
        %v1367 = vadd.f32 0.0, %v1366
        %v1368 = vpop.f32.mrb[0].mxu0
        %v1369 = vpop.f32.mrb[0].mxu0
        %v1370 = vpop.f32.mrb[0].mxu0
        %1371 = vdwg.mxu0
        %v1372 = vpack.c.bf16 %v1367, %v1367
        %v1373 = vld [vmem:[#allocation14 + $0x8] sm:$0xf]
        %v1375 = vsel %vm951, %v1372, 0
        %v1378 = vsel %vm955, %v1373, 0
        %1380 = vmatprep.subr.bf16.mxu0 0
        %1381 = vmatpush1.bf16.msra.mxu0 %v1378
        %1382 = vmatprep.subr.bf16.mxu0 0
        %1383 = vmatpush1.bf16.msra.mxu0 0
        %1384 = vmatprep.subr.bf16.mxu0 0
        %1385 = vmatpush1.bf16.msra.mxu0 0
        %1386 = vmatprep.subr.bf16.mxu0 0
        %1387 = vmatpush1.bf16.msra.mxu0 0
        %1388 = vmatprep.subr.bf16.mxu0 0
        %1389 = vmatpush1.bf16.msra.mxu0 0
        %1390 = vmatprep.subr.bf16.mxu0 0
        %1391 = vmatpush1.bf16.msra.mxu0 0
        %1392 = vmatprep.subr.bf16.mxu0 0
        %1393 = vmatpush1.bf16.msra.mxu0 0
        %1394 = vmatprep.subr.bf16.mxu0 0
        %1395 = vmatpush1.bf16.msra.mxu0 0
        %1396 = vmatprep.subr.bf16.mxu0 0
        %1397 = vmatpush1.bf16.msra.mxu0 0
        %1398 = vmatprep.subr.bf16.mxu0 0
        %1399 = vmatpush1.bf16.msra.mxu0 0
        %1400 = vmatprep.subr.bf16.mxu0 0
        %1401 = vmatpush1.bf16.msra.mxu0 0
        %1402 = vmatprep.subr.bf16.mxu0 0
        %1403 = vmatpush1.bf16.msra.mxu0 0
        %1404 = vmatprep.subr.bf16.mxu0 0
        %1405 = vmatpush1.bf16.msra.mxu0 0
        %1406 = vmatprep.subr.bf16.mxu0 0
        %1407 = vmatpush1.bf16.msra.mxu0 0
        %1408 = vmatprep.subr.bf16.mxu0 0
        %1409 = vmatpush1.bf16.msra.mxu0 0
        %1410 = vmatprep.subr.bf16.mxu0 0
        %1411 = vmatpush1.bf16.msra.mxu0 0
        %1412 = vmatprep.mubr.bf16.mxu0 0
        %1413 = vmatmul.mubr.bf16.gmra.mrb[0].mxu0 %v1375
        %v1414 = vpop.f32.mrb[0].mxu0
        %v1415 = vadd.f32 0.0, %v1414
        %v1416 = vpop.f32.mrb[0].mxu0
        %v1417 = vpop.f32.mrb[0].mxu0
        %v1418 = vpop.f32.mrb[0].mxu0
        %1419 = vdwg.mxu0
        %v1420 = vadd.f32 %v1258, %v1415
        %s1421 = scalar_lea.vmem [#allocation2], 12
        %v1422 = vld [vmem:[%s1421] sm:$0xf]
        %1423 = vrot.lane.b32.xlu0 %v943, 104
        %v1424 = vpop.permute.xlu0 %1423
        %v1426 = vsel %vm951, %v1424, 0
        %v1429 = vsel %vm955, %v1422, 0
        %1431 = vmatprep.subr.bf16.mxu0 0
        %1432 = vmatpush1.bf16.msra.mxu0 %v1429
        %1433 = vmatprep.subr.bf16.mxu0 0
        %1434 = vmatpush1.bf16.msra.mxu0 0
        %1435 = vmatprep.subr.bf16.mxu0 0
        %1436 = vmatpush1.bf16.msra.mxu0 0
        %1437 = vmatprep.subr.bf16.mxu0 0
        %1438 = vmatpush1.bf16.msra.mxu0 0
        %1439 = vmatprep.subr.bf16.mxu0 0
        %1440 = vmatpush1.bf16.msra.mxu0 0
        %1441 = vmatprep.subr.bf16.mxu0 0
        %1442 = vmatpush1.bf16.msra.mxu0 0
        %1443 = vmatprep.subr.bf16.mxu0 0
        %1444 = vmatpush1.bf16.msra.mxu0 0
        %1445 = vmatprep.subr.bf16.mxu0 0
        %1446 = vmatpush1.bf16.msra.mxu0 0
        %1447 = vmatprep.subr.bf16.mxu0 0
        %1448 = vmatpush1.bf16.msra.mxu0 0
        %1449 = vmatprep.subr.bf16.mxu0 0
        %1450 = vmatpush1.bf16.msra.mxu0 0
        %1451 = vmatprep.subr.bf16.mxu0 0
        %1452 = vmatpush1.bf16.msra.mxu0 0
        %1453 = vmatprep.subr.bf16.mxu0 0
        %1454 = vmatpush1.bf16.msra.mxu0 0
        %1455 = vmatprep.subr.bf16.mxu0 0
        %1456 = vmatpush1.bf16.msra.mxu0 0
        %1457 = vmatprep.subr.bf16.mxu0 0
        %1458 = vmatpush1.bf16.msra.mxu0 0
        %1459 = vmatprep.subr.bf16.mxu0 0
        %1460 = vmatpush1.bf16.msra.mxu0 0
        %1461 = vmatprep.subr.bf16.mxu0 0
        %1462 = vmatpush1.bf16.msra.mxu0 0
        %1463 = vmatprep.mubr.bf16.mxu0 0
        %1464 = vmatmul.mubr.bf16.gmra.mrb[0].mxu0 %v1426
        %v1465 = vpop.f32.mrb[0].mxu0
        %v1466 = vadd.f32 %v949, %v1465
        %v1467 = vpop.f32.mrb[0].mxu0
        %v1468 = vpop.f32.mrb[0].mxu0
        %v1469 = vpop.f32.mrb[0].mxu0
        %1470 = vdwg.mxu0
        %v1471 = vsel %vm999, %v1466, -inf
        %1472 = vmax.xlane.f32.xlu0 %v1471
        %v1473 = vpop.xlane.xlu0 %1472
        %v1474 = vsub.f32 %v1466, %v1473
        %v1475 = vmul.f32 %v1474, 1.442695
        %v1476 = vpow.pop %v1475
        %v1477 = vsel %vm999, %v1476, 0.0
        %1478 = vadd.xlane.f32.xlu0 %v1477
        %v1479 = vpop.xlane.xlu0 %1478
        %v1480 = vrcp.pop %v1479
        %v1481 = vmul.f32 %v1476, %v1480
        %s1482 = scalar_lea.vmem %s537, 24 [#allocation17]
        %1483 = vst.msk [vmem:[%s1482] sm:$0xff] %vm999, %v1481
        %v1484 = vpack.c.bf16 %v1481, %v1481
        %s1485 = scalar_lea.vmem [#allocation3], 24
        %v1486 = vld [vmem:[%s1485] sm:$0xff]
        %v1488 = vsel %vm999, %v1484, 0
        %1490 = vmatprep.subr.bf16.mxu0 0
        %1491 = vmatpush1.bf16.msra.mxu0 %v1486
        %1492 = vmatprep.subr.bf16.mxu0 0
        %1493 = vmatpush1.bf16.msra.mxu0 0
        %1494 = vmatprep.subr.bf16.mxu0 0
        %1495 = vmatpush1.bf16.msra.mxu0 0
        %1496 = vmatprep.subr.bf16.mxu0 0
        %1497 = vmatpush1.bf16.msra.mxu0 0
        %1498 = vmatprep.subr.bf16.mxu0 0
        %1499 = vmatpush1.bf16.msra.mxu0 0
        %1500 = vmatprep.subr.bf16.mxu0 0
        %1501 = vmatpush1.bf16.msra.mxu0 0
        %1502 = vmatprep.subr.bf16.mxu0 0
        %1503 = vmatpush1.bf16.msra.mxu0 0
        %1504 = vmatprep.subr.bf16.mxu0 0
        %1505 = vmatpush1.bf16.msra.mxu0 0
        %1506 = vmatprep.subr.bf16.mxu0 0
        %1507 = vmatpush1.bf16.msra.mxu0 0
        %1508 = vmatprep.subr.bf16.mxu0 0
        %1509 = vmatpush1.bf16.msra.mxu0 0
        %1510 = vmatprep.subr.bf16.mxu0 0
        %1511 = vmatpush1.bf16.msra.mxu0 0
        %1512 = vmatprep.subr.bf16.mxu0 0
        %1513 = vmatpush1.bf16.msra.mxu0 0
        %1514 = vmatprep.subr.bf16.mxu0 0
        %1515 = vmatpush1.bf16.msra.mxu0 0
        %1516 = vmatprep.subr.bf16.mxu0 0
        %1517 = vmatpush1.bf16.msra.mxu0 0
        %1518 = vmatprep.subr.bf16.mxu0 0
        %1519 = vmatpush1.bf16.msra.mxu0 0
        %1520 = vmatprep.subr.bf16.mxu0 0
        %1521 = vmatpush1.bf16.msra.mxu0 0
        %1522 = vmatprep.mubr.bf16.mxu0 0
        %1523 = vmatmul.mubr.bf16.gmra.mrb[0].mxu0 %v1488
        %v1524 = vpop.f32.mrb[0].mxu0
        %v1525 = vadd.f32 0.0, %v1524
        %v1526 = vpop.f32.mrb[0].mxu0
        %v1527 = vpop.f32.mrb[0].mxu0
        %v1528 = vpop.f32.mrb[0].mxu0
        %1529 = vdwg.mxu0
        %v1530 = vpack.c.bf16 %v1525, %v1525
        %v1531 = vld [vmem:[#allocation14 + $0xc] sm:$0xf]
        %v1533 = vsel %vm951, %v1530, 0
        %v1536 = vsel %vm955, %v1531, 0
        %1538 = vmatprep.subr.bf16.mxu0 0
        %1539 = vmatpush1.bf16.msra.mxu0 %v1536
        %1540 = vmatprep.subr.bf16.mxu0 0
        %1541 = vmatpush1.bf16.msra.mxu0 0
        %1542 = vmatprep.subr.bf16.mxu0 0
        %1543 = vmatpush1.bf16.msra.mxu0 0
        %1544 = vmatprep.subr.bf16.mxu0 0
        %1545 = vmatpush1.bf16.msra.mxu0 0
        %1546 = vmatprep.subr.bf16.mxu0 0
        %1547 = vmatpush1.bf16.msra.mxu0 0
        %1548 = vmatprep.subr.bf16.mxu0 0
        %1549 = vmatpush1.bf16.msra.mxu0 0
        %1550 = vmatprep.subr.bf16.mxu0 0
        %1551 = vmatpush1.bf16.msra.mxu0 0
        %1552 = vmatprep.subr.bf16.mxu0 0
        %1553 = vmatpush1.bf16.msra.mxu0 0
        %1554 = vmatprep.subr.bf16.mxu0 0
        %1555 = vmatpush1.bf16.msra.mxu0 0
        %1556 = vmatprep.subr.bf16.mxu0 0
        %1557 = vmatpush1.bf16.msra.mxu0 0
        %1558 = vmatprep.subr.bf16.mxu0 0
        %1559 = vmatpush1.bf16.msra.mxu0 0
        %1560 = vmatprep.subr.bf16.mxu0 0
        %1561 = vmatpush1.bf16.msra.mxu0 0
        %1562 = vmatprep.subr.bf16.mxu0 0
        %1563 = vmatpush1.bf16.msra.mxu0 0
        %1564 = vmatprep.subr.bf16.mxu0 0
        %1565 = vmatpush1.bf16.msra.mxu0 0
        %1566 = vmatprep.subr.bf16.mxu0 0
        %1567 = vmatpush1.bf16.msra.mxu0 0
        %1568 = vmatprep.subr.bf16.mxu0 0
        %1569 = vmatpush1.bf16.msra.mxu0 0
        %1570 = vmatprep.mubr.bf16.mxu0 0
        %1571 = vmatmul.mubr.bf16.gmra.mrb[0].mxu0 %v1533
        %v1572 = vpop.f32.mrb[0].mxu0
        %v1573 = vadd.f32 0.0, %v1572
        %v1574 = vpop.f32.mrb[0].mxu0
        %v1575 = vpop.f32.mrb[0].mxu0
        %v1576 = vpop.f32.mrb[0].mxu0
        %1577 = vdwg.mxu0
        %v1578 = vadd.f32 %v1420, %v1573
        %v1579 = vld [vmem:[%s8 + $0x3] sm:$0x1]
        %v1580 = vlaneseq
        %v1581 = vshrl.u32 %v1580, 7
        %v1582 = vsub.s32 0, %v1581
        %v1583 = vrot.slane %v1579, %v1582
        %v1584 = vadd.f32 %v1578, %v1583
        %1585 = vst.msk [vmem:[%s530] sm:$0xff] %vm897, %v1584
        %s1586 = sand.u32 %s269, 1
        %s1587 = scalar_lea.sflag [#allocation7], %s1586
        %s1588 = sand.u32 %s269, 1
        %s1589 = smul.addr %s1588, 8
        %s1590 = scalar_lea.vmem [#allocation16], %s1589
        %s1591 = sand.u32 %s297, 1
        %s1592 = scalar_lea.sflag [#allocation18], %s1591
        %s1593 = sand.u32 %s297, 1
        %s1594 = smul.addr %s1593, 32
        %s1595 = scalar_lea.vmem [#allocation17], %s1594
        // Predicated region
        $region85: #{tpu_custom_call.1} parent=55 // pred_check
          %p1596 = pneg %p279
        $region86: #{tpu_custom_call.1} parent=55 // pred_check_branch
          %1598 = sbr.rel (%p1596) target = $region88
        $region87: #{tpu_custom_call.1} parent=55 // pred_region
          %s1600 = ssub.s32 128, 128
          %1601 = vsyncadd %s1587, %s1600
          %s1602 = smul.addr %s40, 2
          %s1603 = sadd.s32 %s41, %s1602
          %s1604 = smul.addr %s1603, 128
          %s1605 = scalar_lea.hbm %s9, %s1604
          %s1607 = sshll.u32 %s1590, 4
          %s1608 = int_to_ptr.vmem [resolvable:$true] %s1607
          %1610 = dma.vmem_to_hbm [thread:$0]  %s1608, 128, %s1605, %s1587
        $region88: #{tpu_custom_call.1} parent=55 // pred_fallthru
          _
        // Predicated region
        $region89: #{tpu_custom_call.1} parent=55 // pred_check
          %p1611 = pneg %p307
        $region90: #{tpu_custom_call.1} parent=55 // pred_check_branch
          %1613 = sbr.rel (%p1611) target = $region92
        $region91: #{tpu_custom_call.1} parent=55 // pred_region
          %s1615 = ssub.s32 512, 512
          %1616 = vsyncadd %s1592, %s1615
          %s1617 = smul.addr %s40, 8
          %s1618 = sadd.s32 %s41, %s1617
          %s1619 = smul.addr %s1618, 128
          %s1620 = scalar_lea.hbm %s10, %s1619
          %s1621 = sshll.u32 %s1595, 4
          %s1622 = int_to_ptr.vmem [resolvable:$true] %s1621
          %1627 = dma.vmem_to_hbm [thread:$0]  %s1622, 512, %s1620, %s1592, 128, 256, 8
        $region92: #{tpu_custom_call.1} parent=55 // pred_fallthru
          _
      $region56: #{tpu_custom_call.1} parent=5 // pred_fallthru
        _
      %p1628 = scmp.le.s32.totalorder 2, %s31
      // Predicated region
      $region93: #{tpu_custom_call.1} parent=5 // pred_check
        %p1629 = pneg %p1628
      $region94: #{tpu_custom_call.1} parent=5 // pred_check_branch
        %1631 = sbr.rel (%p1629) target = $region96
      $region95: #{tpu_custom_call.1} parent=5 // pred_region
        %s1632 = ssub.s32 %s31, 2
        // Predicated region
        $region97: #{tpu_custom_call.1} parent=95 // pred_check
          %p1633 = pneg %p285
        $region98: #{tpu_custom_call.1} parent=95 // pred_check_branch
          %1635 = sbr.rel (%p1633) target = $region100
        $region99: #{tpu_custom_call.1} parent=95 // pred_region
          %s1636 = sand.u32 %s270, 1
          %s1637 = scalar_lea.sflag [#allocation7], %s1636
          %s1638 = sand.u32 %s270, 1
          %s1639 = smul.addr %s1638, 8
          %s1640 = scalar_lea.vmem [#allocation16], %s1639
          %1641 = dma.done %s1637, 128
        $region100: #{tpu_custom_call.1} parent=95 // pred_fallthru
          _
        // Predicated region
        $region101: #{tpu_custom_call.1} parent=95 // pred_check
          %p1642 = pneg %p313
        $region102: #{tpu_custom_call.1} parent=95 // pred_check_branch
          %1644 = sbr.rel (%p1642) target = $region104
        $region103: #{tpu_custom_call.1} parent=95 // pred_region
          %s1645 = sand.u32 %s298, 1
          %s1646 = scalar_lea.sflag [#allocation18], %s1645
          %s1647 = sand.u32 %s298, 1
          %s1648 = smul.addr %s1647, 32
          %s1649 = scalar_lea.vmem [#allocation17], %s1648
          %1650 = dma.done %s1646, 512
        $region104: #{tpu_custom_call.1} parent=95 // pred_fallthru
          _
      $region96: #{tpu_custom_call.1} parent=5 // pred_fallthru
        _
    $region6: #{tpu_custom_call.1} parent=1 // loop_footer
      %s35 = sadd.s32 1, %s31
    $region7: #{tpu_custom_call.1} parent=1 // loop_footer_branch
      %30 = sbr.rel target = $region3
    $region8: #{tpu_custom_call.1} parent=1 // loop_exit
      _
    %1651 = vsyncpa [#allocation6], 1
    %s1652 = scalar_lea.sflag [#allocation6], 1
    %1653 = vsyncpa %s1652, 1
    %1654 = vsyncpa [#allocation9], 1
    %s1655 = scalar_lea.sflag [#allocation9], 1
    %1656 = vsyncpa %s1655, 1
    %1657 = vsyncpa [#allocation12], 1
    %1658 = vsyncpa [#allocation15], 1
    %1659 = vsyncpa [#allocation7], 1
    %s1660 = scalar_lea.sflag [#allocation7], 1
    %1661 = vsyncpa %s1660, 1
    %1662 = vsyncpa [#allocation18], 1
    %s1663 = scalar_lea.sflag [#allocation18], 1
    %1664 = vsyncpa %s1663, 1

</llo_original>
